<compile_context>
chip_gen: v7x
topology: tpu7x:2x2x1
jax: 0.10.0
libtpu: 0.0.40
codegen_flags: <defaults>
</compile_context>

<pallas_src>
import functools

import jax
import jax.numpy as jnp
from jax.experimental import pallas as pl
from jax.experimental.pallas import tpu as pltpu

EPS = 1e-5                      # F.layer_norm default
NEG_INF = -3.3895314e38         # ~ -torch.finfo(float32).max


def _attention_kernel(x_ref, gamma_ref, beta_ref, wq_ref, wk_ref, wv_ref, wo_ref,
                      o_ref, *, heads, causal):
    # x_ref / o_ref: (N, D) for the current batch element (batch dim squeezed).
    x = x_ref[...].astype(jnp.float32)           # raw input; also the kv input
    gamma = gamma_ref[...].astype(jnp.float32)   # (1, D)
    beta = beta_ref[...].astype(jnp.float32)     # (1, D)

    n, d = x.shape
    dh = wk_ref.shape[1]
    scale = dh ** -0.5

    # ---- LayerNorm over last dim (queries only), f32 accumulation ----
    mean = jnp.mean(x, axis=-1, keepdims=True)
    xc = x - mean
    var = jnp.mean(xc * xc, axis=-1, keepdims=True)
    ln = xc * jax.lax.rsqrt(var + EPS) * gamma + beta          # (N, D)

    wq = wq_ref[...].astype(jnp.float32)                       # (D, H*Dh)
    wk = wk_ref[...].astype(jnp.float32)                       # (D, Dh)
    wv = wv_ref[...].astype(jnp.float32)                       # (D, Dh)
    wo = wo_ref[...].astype(jnp.float32)                       # (H*Dh, D)

    q = jnp.dot(ln, wq, preferred_element_type=jnp.float32) * scale  # (N, H*Dh)
    k = jnp.dot(x, wk, preferred_element_type=jnp.float32)           # (N, Dh) shared across heads
    v = jnp.dot(x, wv, preferred_element_type=jnp.float32)           # (N, Dh)

    if causal:
        row = jax.lax.broadcasted_iota(jnp.int32, (n, n), 0)
        col = jax.lax.broadcasted_iota(jnp.int32, (n, n), 1)
        causal_mask = col > row

    acc = jnp.zeros((n, d), jnp.float32)
    for h in range(heads):                                     # heads is small & static
        qh = q[:, h * dh:(h + 1) * dh]                         # (N, Dh)
        # qh @ k^T without materializing a transpose
        sim = jax.lax.dot_general(qh, k, (((1,), (1,)), ((), ())),
                                  preferred_element_type=jnp.float32)  # (N, N)
        if causal:
            sim = jnp.where(causal_mask, NEG_INF, sim)
        sim = sim - jnp.max(sim, axis=-1, keepdims=True)
        p = jnp.exp(sim)
        attn = p / jnp.sum(p, axis=-1, keepdims=True)
        # TODO(synk): attn_dropout / output dropout omitted (eval-mode identity);
        # training would use pltpu.prng_seed + pltpu.stateful_bernoulli.
        out_h = jnp.dot(attn, v, preferred_element_type=jnp.float32)   # (N, Dh)
        # rearrange('b h n d -> b n (h d)') @ W_out  ==  sum_h out_h @ W_out[h*Dh:(h+1)*Dh]
        acc = acc + jnp.dot(out_h, wo[h * dh:(h + 1) * dh, :],
                            preferred_element_type=jnp.float32)
    o_ref[...] = acc.astype(o_ref.dtype)


def transformer_attention(x, gamma, beta, wq, wk, wv, wo, *, heads, causal=False):
    """x: (B, N, D).  Default forward path: context/mask/attn_bias/attn_mask/cond_fn = None."""
    B, N, D = x.shape
    inner = wq.shape[1]
    dh = wk.shape[1]
    gamma2 = gamma.reshape(1, D)
    beta2 = beta.reshape(1, D)

    kernel = functools.partial(_attention_kernel, heads=heads, causal=causal)

    return pl.pallas_call(
        kernel,
        out_shape=jax.ShapeDtypeStruct((B, N, D), x.dtype),
        grid_spec=pltpu.PrefetchScalarGridSpec(
            num_scalar_prefetch=0,
            grid=(B,),
            in_specs=[
                pl.BlockSpec((None, N, D), lambda b: (b, 0, 0)),   # x (batch squeezed)
                pl.BlockSpec((1, D), lambda b: (0, 0)),            # gamma (resident)
                pl.BlockSpec((1, D), lambda b: (0, 0)),            # beta  (resident)
                pl.BlockSpec((D, inner), lambda b: (0, 0)),        # W_q   (resident)
                pl.BlockSpec((D, dh), lambda b: (0, 0)),           # W_k   (resident)
                pl.BlockSpec((D, dh), lambda b: (0, 0)),           # W_v   (resident)
                pl.BlockSpec((inner, D), lambda b: (0, 0)),        # W_out (resident)
            ],
            out_specs=pl.BlockSpec((None, N, D), lambda b: (b, 0, 0)),
        ),
        compiler_params=pltpu.CompilerParams(
            dimension_semantics=("parallel",),   # batch axis shards across TCs on v7x
        ),
    )(x, gamma2, beta2, wq, wk, wv, wo)


if __name__ == "__main__":
    key = jax.random.PRNGKey(0)
    B, N, DIM = 2, 16, 128            # lane-dense model dim (multiple of 128)
    HEADS, DIM_HEAD = 4, 32
    INNER = HEADS * DIM_HEAD

    k0, k1, k2, k3 = jax.random.split(key, 4)
    x = jax.random.normal(k0, (B, N, DIM), dtype=jnp.float32)
    wq = jax.random.normal(k1, (DIM, INNER), jnp.float32) * (DIM ** -0.5)
    wkv = jax.random.normal(k2, (DIM, 2 * DIM_HEAD), jnp.float32) * (DIM ** -0.5)
    wo = jax.random.normal(k3, (INNER, DIM), jnp.float32) * (INNER ** -0.5)
    gamma = jnp.ones((DIM,), jnp.float32)     # nn.Parameter(torch.ones(dim))
    beta = jnp.zeros((DIM,), jnp.float32)     # register_buffer('beta', zeros(dim))
    wk, wv = wkv[:, :DIM_HEAD], wkv[:, DIM_HEAD:]   # to_kv(...).chunk(2, dim=-1)

    y = transformer_attention(x, gamma, beta, wq, wk, wv, wo, heads=HEADS, causal=False)
    y = jax.block_until_ready(y)

    # Pure-JAX reference of TransformerAttention.forward (eval mode, defaults).
    mean = jnp.mean(x, -1, keepdims=True)
    var = jnp.mean((x - mean) ** 2, -1, keepdims=True)
    ln = (x - mean) / jnp.sqrt(var + EPS) * gamma + beta
    q = (ln @ wq).reshape(B, N, HEADS, DIM_HEAD).transpose(0, 2, 1, 3) * (DIM_HEAD ** -0.5)
    kref = x @ wk
    vref = x @ wv
    sim = jnp.einsum("bhid,bjd->bhij", q, kref)
    attn = jax.nn.softmax(sim, axis=-1)
    out = jnp.einsum("bhij,bjd->bhid", attn, vref)
    out = out.transpose(0, 2, 1, 3).reshape(B, N, INNER)
    ref = out @ wo

    err = float(jnp.max(jnp.abs(y - ref)))
    assert err < 2e-3, f"max abs diff {err}"
    print("KERNEL_OK")
</pallas_src>

<mosaic_0001>
module attributes {stable_mosaic.version = 11 : i64} {
  func.func @_attention_kernel(%arg0: i32, %arg1: memref<1x16x128xf32, #tpu.memory_space<vmem>>, %arg2: memref<1x128xf32, #tpu.memory_space<vmem>>, %arg3: memref<1x128xf32, #tpu.memory_space<vmem>>, %arg4: memref<128x128xf32, #tpu.memory_space<vmem>>, %arg5: memref<128x32xf32, #tpu.memory_space<vmem>>, %arg6: memref<128x32xf32, #tpu.memory_space<vmem>>, %arg7: memref<128x128xf32, #tpu.memory_space<vmem>>, %arg8: memref<1x16x128xf32, #tpu.memory_space<vmem>>) attributes {dimension_semantics = [#tpu.dimension_semantics<parallel>], iteration_bounds = array<i64: 2>, scalar_prefetch = 0 : i64, scratch_operands = 0 : i64, tpu.core_type = #tpu.core_type<tc>, window_params = [{transform_indices = @transform_0, window_bounds = array<i64: 1, 16, 128>}, {pipeline_mode = #tpu.pipeline_mode<synchronous>, transform_indices = @transform_1, window_bounds = array<i64: 1, 128>}, {pipeline_mode = #tpu.pipeline_mode<synchronous>, transform_indices = @transform_2, window_bounds = array<i64: 1, 128>}, {pipeline_mode = #tpu.pipeline_mode<synchronous>, transform_indices = @transform_3, window_bounds = array<i64: 128, 128>}, {pipeline_mode = #tpu.pipeline_mode<synchronous>, transform_indices = @transform_4, window_bounds = array<i64: 128, 32>}, {pipeline_mode = #tpu.pipeline_mode<synchronous>, transform_indices = @transform_5, window_bounds = array<i64: 128, 32>}, {pipeline_mode = #tpu.pipeline_mode<synchronous>, transform_indices = @transform_6, window_bounds = array<i64: 128, 128>}, {transform_indices = @transform_7, window_bounds = array<i64: 1, 16, 128>}]} {
    %c0 = arith.constant 0 : index
    %c0_0 = arith.constant 0 : index
    %c0_1 = arith.constant 0 : index
    %0 = vector.load %arg1[%c0, %c0_0, %c0_1] : memref<1x16x128xf32, #tpu.memory_space<vmem>>, vector<1x16x128xf32>
    %1 = vector.shape_cast %0 : vector<1x16x128xf32> to vector<16x128xf32>
    %c0_2 = arith.constant 0 : index
    %c0_3 = arith.constant 0 : index
    %2 = vector.load %arg2[%c0_2, %c0_3] : memref<1x128xf32, #tpu.memory_space<vmem>>, vector<1x128xf32>
    %c0_4 = arith.constant 0 : index
    %c0_5 = arith.constant 0 : index
    %3 = vector.load %arg3[%c0_4, %c0_5] : memref<1x128xf32, #tpu.memory_space<vmem>>, vector<1x128xf32>
    %cst = arith.constant dense<0.000000e+00> : vector<16xf32>
    %4 = vector.multi_reduction <add>, %1, %cst [1] : vector<16x128xf32> to vector<16xf32>
    %5 = vector.shape_cast %4 : vector<16xf32> to vector<16x1xf32>
    %cst_6 = arith.constant 1.280000e+02 : f32
    %6 = vector.broadcast %cst_6 : f32 to vector<16x1xf32>
    %7 = arith.divf %5, %6 : vector<16x1xf32>
    %8 = vector.broadcast %7 : vector<16x1xf32> to vector<16x128xf32>
    %9 = arith.subf %1, %8 : vector<16x128xf32>
    %10 = arith.mulf %9, %9 : vector<16x128xf32>
    %cst_7 = arith.constant dense<0.000000e+00> : vector<16xf32>
    %11 = vector.multi_reduction <add>, %10, %cst_7 [1] : vector<16x128xf32> to vector<16xf32>
    %12 = vector.shape_cast %11 : vector<16xf32> to vector<16x1xf32>
    %cst_8 = arith.constant 1.280000e+02 : f32
    %13 = vector.broadcast %cst_8 : f32 to vector<16x1xf32>
    %14 = arith.divf %12, %13 : vector<16x1xf32>
    %cst_9 = arith.constant 9.99999974E-6 : f32
    %15 = vector.broadcast %cst_9 : f32 to vector<16x1xf32>
    %16 = arith.addf %14, %15 : vector<16x1xf32>
    %17 = math.rsqrt %16 : vector<16x1xf32>
    %18 = vector.broadcast %17 : vector<16x1xf32> to vector<16x128xf32>
    %19 = arith.mulf %9, %18 : vector<16x128xf32>
    %20 = vector.broadcast %2 : vector<1x128xf32> to vector<16x128xf32>
    %21 = arith.mulf %19, %20 : vector<16x128xf32>
    %22 = vector.broadcast %3 : vector<1x128xf32> to vector<16x128xf32>
    %23 = arith.addf %21, %22 : vector<16x128xf32>
    %c0_10 = arith.constant 0 : index
    %c0_11 = arith.constant 0 : index
    %24 = vector.load %arg4[%c0_10, %c0_11] : memref<128x128xf32, #tpu.memory_space<vmem>>, vector<128x128xf32>
    %c0_12 = arith.constant 0 : index
    %c0_13 = arith.constant 0 : index
    %25 = vector.load %arg5[%c0_12, %c0_13] : memref<128x32xf32, #tpu.memory_space<vmem>>, vector<128x32xf32>
    %c0_14 = arith.constant 0 : index
    %c0_15 = arith.constant 0 : index
    %26 = vector.load %arg6[%c0_14, %c0_15] : memref<128x32xf32, #tpu.memory_space<vmem>>, vector<128x32xf32>
    %c0_16 = arith.constant 0 : index
    %c0_17 = arith.constant 0 : index
    %27 = vector.load %arg7[%c0_16, %c0_17] : memref<128x128xf32, #tpu.memory_space<vmem>>, vector<128x128xf32>
    %cst_18 = arith.constant dense<0.000000e+00> : vector<16x128xf32>
    %28 = tpu.matmul %23, %24, %cst_18 {dimension_numbers = #tpu.dot_dimension_numbers<[1], [0], [0], [1], [0, 0, 1, 1], [], []>} : vector<16x128xf32>, vector<128x128xf32>, vector<16x128xf32> -> vector<16x128xf32>
    %cst_19 = arith.constant 0.176776692 : f32
    %29 = vector.broadcast %cst_19 : f32 to vector<16x128xf32>
    %30 = arith.mulf %28, %29 : vector<16x128xf32>
    %cst_20 = arith.constant dense<0.000000e+00> : vector<16x32xf32>
    %31 = tpu.matmul %1, %25, %cst_20 {dimension_numbers = #tpu.dot_dimension_numbers<[1], [0], [0], [1], [0, 0, 1, 1], [], []>} : vector<16x128xf32>, vector<128x32xf32>, vector<16x32xf32> -> vector<16x32xf32>
    %cst_21 = arith.constant dense<0.000000e+00> : vector<16x32xf32>
    %32 = tpu.matmul %1, %26, %cst_21 {dimension_numbers = #tpu.dot_dimension_numbers<[1], [0], [0], [1], [0, 0, 1, 1], [], []>} : vector<16x128xf32>, vector<128x32xf32>, vector<16x32xf32> -> vector<16x32xf32>
    %cst_22 = arith.constant 0.000000e+00 : f32
    %33 = vector.broadcast %cst_22 : f32 to vector<16x128xf32>
    %34 = vector.extract_strided_slice %30 {offsets = [0, 0], sizes = [16, 32], strides = [1, 1]} : vector<16x128xf32> to vector<16x32xf32>
    %cst_23 = arith.constant dense<0.000000e+00> : vector<16x16xf32>
    %35 = tpu.matmul %34, %31, %cst_23 {dimension_numbers = #tpu.dot_dimension_numbers<[1], [1], [0], [0], [0, 0, 1, 0], [], []>} : vector<16x32xf32>, vector<16x32xf32>, vector<16x16xf32> -> vector<16x16xf32>
    %cst_24 = arith.constant dense<0xFF800000> : vector<16xf32>
    %36 = vector.multi_reduction <maximumf>, %35, %cst_24 [1] : vector<16x16xf32> to vector<16xf32>
    %37 = vector.shape_cast %36 : vector<16xf32> to vector<16x1xf32>
    %38 = vector.broadcast %37 : vector<16x1xf32> to vector<16x16xf32>
    %39 = arith.subf %35, %38 : vector<16x16xf32>
    %40 = math.exp %39 : vector<16x16xf32>
    %cst_25 = arith.constant dense<0.000000e+00> : vector<16xf32>
    %41 = vector.multi_reduction <add>, %40, %cst_25 [1] : vector<16x16xf32> to vector<16xf32>
    %42 = vector.shape_cast %41 : vector<16xf32> to vector<16x1xf32>
    %43 = vector.broadcast %42 : vector<16x1xf32> to vector<16x16xf32>
    %44 = arith.divf %40, %43 : vector<16x16xf32>
    %cst_26 = arith.constant dense<0.000000e+00> : vector<16x32xf32>
    %45 = tpu.matmul %44, %32, %cst_26 {dimension_numbers = #tpu.dot_dimension_numbers<[1], [0], [0], [1], [0, 0, 1, 1], [], []>} : vector<16x16xf32>, vector<16x32xf32>, vector<16x32xf32> -> vector<16x32xf32>
    %46 = vector.extract_strided_slice %27 {offsets = [0, 0], sizes = [32, 128], strides = [1, 1]} : vector<128x128xf32> to vector<32x128xf32>
    %cst_27 = arith.constant dense<0.000000e+00> : vector<16x128xf32>
    %47 = tpu.matmul %45, %46, %cst_27 {dimension_numbers = #tpu.dot_dimension_numbers<[1], [0], [0], [1], [0, 0, 1, 1], [], []>} : vector<16x32xf32>, vector<32x128xf32>, vector<16x128xf32> -> vector<16x128xf32>
    %48 = arith.addf %33, %47 : vector<16x128xf32>
    %49 = vector.extract_strided_slice %30 {offsets = [0, 32], sizes = [16, 32], strides = [1, 1]} : vector<16x128xf32> to vector<16x32xf32>
    %cst_28 = arith.constant dense<0.000000e+00> : vector<16x16xf32>
    %50 = tpu.matmul %49, %31, %cst_28 {dimension_numbers = #tpu.dot_dimension_numbers<[1], [1], [0], [0], [0, 0, 1, 0], [], []>} : vector<16x32xf32>, vector<16x32xf32>, vector<16x16xf32> -> vector<16x16xf32>
    %cst_29 = arith.constant dense<0xFF800000> : vector<16xf32>
    %51 = vector.multi_reduction <maximumf>, %50, %cst_29 [1] : vector<16x16xf32> to vector<16xf32>
    %52 = vector.shape_cast %51 : vector<16xf32> to vector<16x1xf32>
    %53 = vector.broadcast %52 : vector<16x1xf32> to vector<16x16xf32>
    %54 = arith.subf %50, %53 : vector<16x16xf32>
    %55 = math.exp %54 : vector<16x16xf32>
    %cst_30 = arith.constant dense<0.000000e+00> : vector<16xf32>
    %56 = vector.multi_reduction <add>, %55, %cst_30 [1] : vector<16x16xf32> to vector<16xf32>
    %57 = vector.shape_cast %56 : vector<16xf32> to vector<16x1xf32>
    %58 = vector.broadcast %57 : vector<16x1xf32> to vector<16x16xf32>
    %59 = arith.divf %55, %58 : vector<16x16xf32>
    %cst_31 = arith.constant dense<0.000000e+00> : vector<16x32xf32>
    %60 = tpu.matmul %59, %32, %cst_31 {dimension_numbers = #tpu.dot_dimension_numbers<[1], [0], [0], [1], [0, 0, 1, 1], [], []>} : vector<16x16xf32>, vector<16x32xf32>, vector<16x32xf32> -> vector<16x32xf32>
    %61 = vector.extract_strided_slice %27 {offsets = [32, 0], sizes = [32, 128], strides = [1, 1]} : vector<128x128xf32> to vector<32x128xf32>
    %cst_32 = arith.constant dense<0.000000e+00> : vector<16x128xf32>
    %62 = tpu.matmul %60, %61, %cst_32 {dimension_numbers = #tpu.dot_dimension_numbers<[1], [0], [0], [1], [0, 0, 1, 1], [], []>} : vector<16x32xf32>, vector<32x128xf32>, vector<16x128xf32> -> vector<16x128xf32>
    %63 = arith.addf %48, %62 : vector<16x128xf32>
    %64 = vector.extract_strided_slice %30 {offsets = [0, 64], sizes = [16, 32], strides = [1, 1]} : vector<16x128xf32> to vector<16x32xf32>
    %cst_33 = arith.constant dense<0.000000e+00> : vector<16x16xf32>
    %65 = tpu.matmul %64, %31, %cst_33 {dimension_numbers = #tpu.dot_dimension_numbers<[1], [1], [0], [0], [0, 0, 1, 0], [], []>} : vector<16x32xf32>, vector<16x32xf32>, vector<16x16xf32> -> vector<16x16xf32>
    %cst_34 = arith.constant dense<0xFF800000> : vector<16xf32>
    %66 = vector.multi_reduction <maximumf>, %65, %cst_34 [1] : vector<16x16xf32> to vector<16xf32>
    %67 = vector.shape_cast %66 : vector<16xf32> to vector<16x1xf32>
    %68 = vector.broadcast %67 : vector<16x1xf32> to vector<16x16xf32>
    %69 = arith.subf %65, %68 : vector<16x16xf32>
    %70 = math.exp %69 : vector<16x16xf32>
    %cst_35 = arith.constant dense<0.000000e+00> : vector<16xf32>
    %71 = vector.multi_reduction <add>, %70, %cst_35 [1] : vector<16x16xf32> to vector<16xf32>
    %72 = vector.shape_cast %71 : vector<16xf32> to vector<16x1xf32>
    %73 = vector.broadcast %72 : vector<16x1xf32> to vector<16x16xf32>
    %74 = arith.divf %70, %73 : vector<16x16xf32>
    %cst_36 = arith.constant dense<0.000000e+00> : vector<16x32xf32>
    %75 = tpu.matmul %74, %32, %cst_36 {dimension_numbers = #tpu.dot_dimension_numbers<[1], [0], [0], [1], [0, 0, 1, 1], [], []>} : vector<16x16xf32>, vector<16x32xf32>, vector<16x32xf32> -> vector<16x32xf32>
    %76 = vector.extract_strided_slice %27 {offsets = [64, 0], sizes = [32, 128], strides = [1, 1]} : vector<128x128xf32> to vector<32x128xf32>
    %cst_37 = arith.constant dense<0.000000e+00> : vector<16x128xf32>
    %77 = tpu.matmul %75, %76, %cst_37 {dimension_numbers = #tpu.dot_dimension_numbers<[1], [0], [0], [1], [0, 0, 1, 1], [], []>} : vector<16x32xf32>, vector<32x128xf32>, vector<16x128xf32> -> vector<16x128xf32>
    %78 = arith.addf %63, %77 : vector<16x128xf32>
    %79 = vector.extract_strided_slice %30 {offsets = [0, 96], sizes = [16, 32], strides = [1, 1]} : vector<16x128xf32> to vector<16x32xf32>
    %cst_38 = arith.constant dense<0.000000e+00> : vector<16x16xf32>
    %80 = tpu.matmul %79, %31, %cst_38 {dimension_numbers = #tpu.dot_dimension_numbers<[1], [1], [0], [0], [0, 0, 1, 0], [], []>} : vector<16x32xf32>, vector<16x32xf32>, vector<16x16xf32> -> vector<16x16xf32>
    %cst_39 = arith.constant dense<0xFF800000> : vector<16xf32>
    %81 = vector.multi_reduction <maximumf>, %80, %cst_39 [1] : vector<16x16xf32> to vector<16xf32>
    %82 = vector.shape_cast %81 : vector<16xf32> to vector<16x1xf32>
    %83 = vector.broadcast %82 : vector<16x1xf32> to vector<16x16xf32>
    %84 = arith.subf %80, %83 : vector<16x16xf32>
    %85 = math.exp %84 : vector<16x16xf32>
    %cst_40 = arith.constant dense<0.000000e+00> : vector<16xf32>
    %86 = vector.multi_reduction <add>, %85, %cst_40 [1] : vector<16x16xf32> to vector<16xf32>
    %87 = vector.shape_cast %86 : vector<16xf32> to vector<16x1xf32>
    %88 = vector.broadcast %87 : vector<16x1xf32> to vector<16x16xf32>
    %89 = arith.divf %85, %88 : vector<16x16xf32>
    %cst_41 = arith.constant dense<0.000000e+00> : vector<16x32xf32>
    %90 = tpu.matmul %89, %32, %cst_41 {dimension_numbers = #tpu.dot_dimension_numbers<[1], [0], [0], [1], [0, 0, 1, 1], [], []>} : vector<16x16xf32>, vector<16x32xf32>, vector<16x32xf32> -> vector<16x32xf32>
    %91 = vector.extract_strided_slice %27 {offsets = [96, 0], sizes = [32, 128], strides = [1, 1]} : vector<128x128xf32> to vector<32x128xf32>
    %cst_42 = arith.constant dense<0.000000e+00> : vector<16x128xf32>
    %92 = tpu.matmul %90, %91, %cst_42 {dimension_numbers = #tpu.dot_dimension_numbers<[1], [0], [0], [1], [0, 0, 1, 1], [], []>} : vector<16x32xf32>, vector<32x128xf32>, vector<16x128xf32> -> vector<16x128xf32>
    %93 = arith.addf %78, %92 : vector<16x128xf32>
    %c0_43 = arith.constant 0 : index
    %c0_44 = arith.constant 0 : index
    %c0_45 = arith.constant 0 : index
    %94 = vector.load %arg8[%c0_43, %c0_44, %c0_45] : memref<1x16x128xf32, #tpu.memory_space<vmem>>, vector<1x16x128xf32>
    %95 = vector.shape_cast %94 : vector<1x16x128xf32> to vector<16x128xf32>
    %96 = vector.shape_cast %93 : vector<16x128xf32> to vector<1x16x128xf32>
    tpu.vector_store %arg8[%c0_43, %c0_44, %c0_45], %96 {strides = array<i32>} : memref<1x16x128xf32, #tpu.memory_space<vmem>>, vector<1x16x128xf32>,
    return
  }
  func.func @transform_0(%arg0: i32) -> (i32, i32, i32) {
    %c0_i32 = arith.constant 0 : i32
    %c0_i32_0 = arith.constant 0 : i32
    %c0_i32_1 = arith.constant 0 : i32
    return %arg0, %c0_i32, %c0_i32_0 : i32, i32, i32
  }
  func.func @transform_1(%arg0: i32) -> (i32, i32) {
    %c0_i32 = arith.constant 0 : i32
    %c0_i32_0 = arith.constant 0 : i32
    %c0_i32_1 = arith.constant 0 : i32
    return %c0_i32, %c0_i32_0 : i32, i32
  }
  func.func @transform_2(%arg0: i32) -> (i32, i32) {
    %c0_i32 = arith.constant 0 : i32
    %c0_i32_0 = arith.constant 0 : i32
    %c0_i32_1 = arith.constant 0 : i32
    return %c0_i32, %c0_i32_0 : i32, i32
  }
  func.func @transform_3(%arg0: i32) -> (i32, i32) {
    %c0_i32 = arith.constant 0 : i32
    %c0_i32_0 = arith.constant 0 : i32
    %c0_i32_1 = arith.constant 0 : i32
    return %c0_i32, %c0_i32_0 : i32, i32
  }
  func.func @transform_4(%arg0: i32) -> (i32, i32) {
    %c0_i32 = arith.constant 0 : i32
    %c0_i32_0 = arith.constant 0 : i32
    %c0_i32_1 = arith.constant 0 : i32
    return %c0_i32, %c0_i32_0 : i32, i32
  }
  func.func @transform_5(%arg0: i32) -> (i32, i32) {
    %c0_i32 = arith.constant 0 : i32
    %c0_i32_0 = arith.constant 0 : i32
    %c0_i32_1 = arith.constant 0 : i32
    return %c0_i32, %c0_i32_0 : i32, i32
  }
  func.func @transform_6(%arg0: i32) -> (i32, i32) {
    %c0_i32 = arith.constant 0 : i32
    %c0_i32_0 = arith.constant 0 : i32
    %c0_i32_1 = arith.constant 0 : i32
    return %c0_i32, %c0_i32_0 : i32, i32
  }
  func.func @transform_7(%arg0: i32) -> (i32, i32, i32) {
    %c0_i32 = arith.constant 0 : i32
    %c0_i32_0 = arith.constant 0 : i32
    %c0_i32_1 = arith.constant 0 : i32
    return %arg0, %c0_i32, %c0_i32_0 : i32, i32, i32
  }
}

</mosaic_0001>

<llo_original>
// kernel: tpu_custom_call.1
$region0: #{tpu_custom_call.1}
  #allocation0 [shape = 'u32[]', space=smem, size = 0x4, offset = 0x4, fixed_abs, tag = 'smem constant byte address 0x4 - core index']
  #allocation1 [shape = 'u32[144,128]{1,0:T(1,128)}', space=vmem, size = 0x12000, scoped, tag = 'internal scratch']
  %s0 = inlined_call_operand.vmem [shape: f32[2,16,128], index: 0, kind: input, shape index: {}]
  %s1 = inlined_call_operand.vmem [shape: f32[1,128], index: 1, kind: input, shape index: {}]
  %s2 = inlined_call_operand.vmem [shape: f32[1,128], index: 2, kind: input, shape index: {}]
  %s3 = inlined_call_operand.vmem [shape: f32[128,128], index: 3, kind: input, shape index: {}]
  %s4 = inlined_call_operand.vmem [shape: f32[128,32], index: 4, kind: input, shape index: {}]
  %s5 = inlined_call_operand.vmem [shape: f32[128,32], index: 5, kind: input, shape index: {}]
  %s6 = inlined_call_operand.vmem [shape: f32[128,128], index: 6, kind: input, shape index: {}]
  %s7 = inlined_call_operand.hbm [shape: f32[2,16,128], index: 7, kind: output, shape index: {}]
  %s8 = sld [smem:[#allocation0]]
  $region61: #{tpu_custom_call.1} parent=0
    _
  %s10 = ssub.s32 1, %s8
  %s11 = scalar_select 0, %s10, %s8
  $region1: #{tpu_custom_call.1} parent=0
    #allocation2 [shape = 'u8[16384]{0}', space=vmem, size = 0x4000, scoped, tag = 'output window, operand 0']
    #allocation3 [shape = 's32[2]{0}', space=sflag, size = 0x8, scoped, tag = 'scoped memory for tpu_custom_call.1']
    %12 = vsyncpa [#allocation3], 0
    %s13 = scalar_lea.sflag [#allocation3], 1
    %14 = vsyncpa %s13, 0
    loop: start=0, step=1, limit=4
    $region2: #{tpu_custom_call.1} parent=1 // loop_pre_header
      _
    $region3: #{tpu_custom_call.1} parent=1 // loop_header
      %s16 = sphi 0, %s20
      %p17 = scmp.ge.s32.totalorder %s16, 4
      %s26 = sphi 0, %s28
      %s29 = sphi 0, %s26
      %s30 = sphi 0, %s29
      %s46 = sphi 0, %s30
      %s50 = sphi 0, %s50
      %s52 = sphi 0, %s50
      %s53 = sphi 0, %s52
      %s67 = sphi 0, %s53
      %s71 = sphi 0, %s71
      %s73 = sphi 0, %s71
      %s74 = sphi 0, %s73
      %s88 = sphi 0, %s74
      %s92 = sphi 0, %s92
      %s94 = sphi 0, %s92
      %s95 = sphi 0, %s94
      %s109 = sphi 0, %s95
      %s113 = sphi 0, %s113
      %s115 = sphi 0, %s113
      %s116 = sphi 0, %s115
      %s130 = sphi 0, %s116
      %s134 = sphi 0, %s134
      %s136 = sphi 0, %s134
      %s137 = sphi 0, %s136
      %s151 = sphi 0, %s137
      %s155 = sphi 0, %s155
      %s157 = sphi 0, %s155
      %s158 = sphi 0, %s157
      %s172 = sphi 0, %s158
      %s178 = sphi 0, %s180
      %s181 = sphi 0, %s178
      %s182 = sphi 0, %s181
      %s198 = sphi 0, %s182
    $region4: #{tpu_custom_call.1} parent=1 // loop_header_branch
      %19 = sbr.rel (%p17) target = $region8
    $region5: #{tpu_custom_call.1} parent=1 // loop_body
      %s21 = ssub.s32 %s16, 1
      %s22 = ssub.s32 %s16, 2
      %s23 = sadd.s32 %s16, 1
      %s24 = ssub.s32 %s16, %s23
      %p25 = scmp.eq.s32.totalorder %s24, 0
      %s27 = sadd.s32 %s26, 1
      %s28 = scalar_select %p25, %s26, %s27
      %p31 = pneg %p25
      %p32 = scmp.eq.s32.totalorder %s16, 1
      %p33 = por %p31, %p32
      %p34 = scmp.ne.s32.totalorder %s26, %s29
      %p35 = scmp.eq.s32.totalorder %s16, 0
      %p36 = por %p34, %p35
      %p37 = scmp.ne.s32.totalorder %s26, %s29
      %p38 = scmp.eq.s32.totalorder %s21, 1
      %p39 = por %p37, %p38
      %p40 = scmp.ne.s32.totalorder %s29, %s30
      %p41 = scmp.eq.s32.totalorder %s21, 0
      %p42 = por %p40, %p41
      %p43 = scmp.ne.s32.totalorder %s29, %s30
      %p44 = scmp.eq.s32.totalorder %s22, 1
      %p45 = por %p43, %p44
      %p47 = scmp.ne.s32.totalorder %s30, %s46
      %p48 = scmp.eq.s32.totalorder %s22, 0
      %p49 = por %p47, %p48
      %s51 = sadd.s32 %s50, 1
      %p54 = scmp.eq.s32.totalorder %s16, 1
      %p55 = scmp.ne.s32.totalorder %s50, %s52
      %p56 = scmp.eq.s32.totalorder %s16, 0
      %p57 = por %p55, %p56
      %p58 = scmp.ne.s32.totalorder %s50, %s52
      %p59 = scmp.eq.s32.totalorder %s21, 1
      %p60 = por %p58, %p59
      %p61 = scmp.ne.s32.totalorder %s52, %s53
      %p62 = scmp.eq.s32.totalorder %s21, 0
      %p63 = por %p61, %p62
      %p64 = scmp.ne.s32.totalorder %s52, %s53
      %p65 = scmp.eq.s32.totalorder %s22, 1
      %p66 = por %p64, %p65
      %p68 = scmp.ne.s32.totalorder %s53, %s67
      %p69 = scmp.eq.s32.totalorder %s22, 0
      %p70 = por %p68, %p69
      %s72 = sadd.s32 %s71, 1
      %p75 = scmp.eq.s32.totalorder %s16, 1
      %p76 = scmp.ne.s32.totalorder %s71, %s73
      %p77 = scmp.eq.s32.totalorder %s16, 0
      %p78 = por %p76, %p77
      %p79 = scmp.ne.s32.totalorder %s71, %s73
      %p80 = scmp.eq.s32.totalorder %s21, 1
      %p81 = por %p79, %p80
      %p82 = scmp.ne.s32.totalorder %s73, %s74
      %p83 = scmp.eq.s32.totalorder %s21, 0
      %p84 = por %p82, %p83
      %p85 = scmp.ne.s32.totalorder %s73, %s74
      %p86 = scmp.eq.s32.totalorder %s22, 1
      %p87 = por %p85, %p86
      %p89 = scmp.ne.s32.totalorder %s74, %s88
      %p90 = scmp.eq.s32.totalorder %s22, 0
      %p91 = por %p89, %p90
      %s93 = sadd.s32 %s92, 1
      %p96 = scmp.eq.s32.totalorder %s16, 1
      %p97 = scmp.ne.s32.totalorder %s92, %s94
      %p98 = scmp.eq.s32.totalorder %s16, 0
      %p99 = por %p97, %p98
      %p100 = scmp.ne.s32.totalorder %s92, %s94
      %p101 = scmp.eq.s32.totalorder %s21, 1
      %p102 = por %p100, %p101
      %p103 = scmp.ne.s32.totalorder %s94, %s95
      %p104 = scmp.eq.s32.totalorder %s21, 0
      %p105 = por %p103, %p104
      %p106 = scmp.ne.s32.totalorder %s94, %s95
      %p107 = scmp.eq.s32.totalorder %s22, 1
      %p108 = por %p106, %p107
      %p110 = scmp.ne.s32.totalorder %s95, %s109
      %p111 = scmp.eq.s32.totalorder %s22, 0
      %p112 = por %p110, %p111
      %s114 = sadd.s32 %s113, 1
      %p117 = scmp.eq.s32.totalorder %s16, 1
      %p118 = scmp.ne.s32.totalorder %s113, %s115
      %p119 = scmp.eq.s32.totalorder %s16, 0
      %p120 = por %p118, %p119
      %p121 = scmp.ne.s32.totalorder %s113, %s115
      %p122 = scmp.eq.s32.totalorder %s21, 1
      %p123 = por %p121, %p122
      %p124 = scmp.ne.s32.totalorder %s115, %s116
      %p125 = scmp.eq.s32.totalorder %s21, 0
      %p126 = por %p124, %p125
      %p127 = scmp.ne.s32.totalorder %s115, %s116
      %p128 = scmp.eq.s32.totalorder %s22, 1
      %p129 = por %p127, %p128
      %p131 = scmp.ne.s32.totalorder %s116, %s130
      %p132 = scmp.eq.s32.totalorder %s22, 0
      %p133 = por %p131, %p132
      %s135 = sadd.s32 %s134, 1
      %p138 = scmp.eq.s32.totalorder %s16, 1
      %p139 = scmp.ne.s32.totalorder %s134, %s136
      %p140 = scmp.eq.s32.totalorder %s16, 0
      %p141 = por %p139, %p140
      %p142 = scmp.ne.s32.totalorder %s134, %s136
      %p143 = scmp.eq.s32.totalorder %s21, 1
      %p144 = por %p142, %p143
      %p145 = scmp.ne.s32.totalorder %s136, %s137
      %p146 = scmp.eq.s32.totalorder %s21, 0
      %p147 = por %p145, %p146
      %p148 = scmp.ne.s32.totalorder %s136, %s137
      %p149 = scmp.eq.s32.totalorder %s22, 1
      %p150 = por %p148, %p149
      %p152 = scmp.ne.s32.totalorder %s137, %s151
      %p153 = scmp.eq.s32.totalorder %s22, 0
      %p154 = por %p152, %p153
      %s156 = sadd.s32 %s155, 1
      %p159 = scmp.eq.s32.totalorder %s16, 1
      %p160 = scmp.ne.s32.totalorder %s155, %s157
      %p161 = scmp.eq.s32.totalorder %s16, 0
      %p162 = por %p160, %p161
      %p163 = scmp.ne.s32.totalorder %s155, %s157
      %p164 = scmp.eq.s32.totalorder %s21, 1
      %p165 = por %p163, %p164
      %p166 = scmp.ne.s32.totalorder %s157, %s158
      %p167 = scmp.eq.s32.totalorder %s21, 0
      %p168 = por %p166, %p167
      %p169 = scmp.ne.s32.totalorder %s157, %s158
      %p170 = scmp.eq.s32.totalorder %s22, 1
      %p171 = por %p169, %p170
      %p173 = scmp.ne.s32.totalorder %s158, %s172
      %p174 = scmp.eq.s32.totalorder %s22, 0
      %p175 = por %p173, %p174
      %s176 = ssub.s32 %s16, %s23
      %p177 = scmp.eq.s32.totalorder %s176, 0
      %s179 = sadd.s32 %s178, 1
      %s180 = scalar_select %p177, %s178, %s179
      %p183 = pneg %p177
      %p184 = scmp.eq.s32.totalorder %s16, 1
      %p185 = por %p183, %p184
      %p186 = scmp.ne.s32.totalorder %s178, %s181
      %p187 = scmp.eq.s32.totalorder %s16, 0
      %p188 = por %p186, %p187
      %p189 = scmp.ne.s32.totalorder %s178, %s181
      %p190 = scmp.eq.s32.totalorder %s21, 1
      %p191 = por %p189, %p190
      %p192 = scmp.ne.s32.totalorder %s181, %s182
      %p193 = scmp.eq.s32.totalorder %s21, 0
      %p194 = por %p192, %p193
      %p195 = scmp.ne.s32.totalorder %s181, %s182
      %p196 = scmp.eq.s32.totalorder %s22, 1
      %p197 = por %p195, %p196
      %p199 = scmp.ne.s32.totalorder %s182, %s198
      %p200 = scmp.eq.s32.totalorder %s22, 0
      %p201 = por %p199, %p200
      %p202 = scmp.le.s32.totalorder 1, %s16
      %p203 = scmp.lt.s32.totalorder %s16, 3
      %p204 = pnand %p202, %p203
      %p205 = pneg %p204
      // Predicated region
      $region9: #{tpu_custom_call.1} parent=5 // pred_check
        _
      $region10: #{tpu_custom_call.1} parent=5 // pred_check_branch
        %207 = sbr.rel (%p204) target = $region12
      $region11: #{tpu_custom_call.1} parent=5 // pred_region
        %s208 = ssub.s32 %s16, 1
        // Predicated region
        $region13: #{tpu_custom_call.1} parent=11 // pred_check
          %p209 = pneg %p63
        $region14: #{tpu_custom_call.1} parent=11 // pred_check_branch
          %211 = sbr.rel (%p209) target = $region16
        $region15: #{tpu_custom_call.1} parent=11 // pred_region
          _
        $region16: #{tpu_custom_call.1} parent=11 // pred_fallthru
          _
        // Predicated region
        $region17: #{tpu_custom_call.1} parent=11 // pred_check
          %p212 = pneg %p84
        $region18: #{tpu_custom_call.1} parent=11 // pred_check_branch
          %214 = sbr.rel (%p212) target = $region20
        $region19: #{tpu_custom_call.1} parent=11 // pred_region
          _
        $region20: #{tpu_custom_call.1} parent=11 // pred_fallthru
          _
        // Predicated region
        $region21: #{tpu_custom_call.1} parent=11 // pred_check
          %p215 = pneg %p105
        $region22: #{tpu_custom_call.1} parent=11 // pred_check_branch
          %217 = sbr.rel (%p215) target = $region24
        $region23: #{tpu_custom_call.1} parent=11 // pred_region
          _
        $region24: #{tpu_custom_call.1} parent=11 // pred_fallthru
          _
        // Predicated region
        $region25: #{tpu_custom_call.1} parent=11 // pred_check
          %p218 = pneg %p126
        $region26: #{tpu_custom_call.1} parent=11 // pred_check_branch
          %220 = sbr.rel (%p218) target = $region28
        $region27: #{tpu_custom_call.1} parent=11 // pred_region
          _
        $region28: #{tpu_custom_call.1} parent=11 // pred_fallthru
          _
        // Predicated region
        $region29: #{tpu_custom_call.1} parent=11 // pred_check
          %p221 = pneg %p147
        $region30: #{tpu_custom_call.1} parent=11 // pred_check_branch
          %223 = sbr.rel (%p221) target = $region32
        $region31: #{tpu_custom_call.1} parent=11 // pred_region
          _
        $region32: #{tpu_custom_call.1} parent=11 // pred_fallthru
          _
        // Predicated region
        $region33: #{tpu_custom_call.1} parent=11 // pred_check
          %p224 = pneg %p168
        $region34: #{tpu_custom_call.1} parent=11 // pred_check_branch
          %226 = sbr.rel (%p224) target = $region36
        $region35: #{tpu_custom_call.1} parent=11 // pred_region
          _
        $region36: #{tpu_custom_call.1} parent=11 // pred_fallthru
          _
      $region12: #{tpu_custom_call.1} parent=5 // pred_fallthru
        _
      %p227 = scmp.lt.s32.totalorder %s16, 2
      // Predicated region
      $region37: #{tpu_custom_call.1} parent=5 // pred_check
        %p228 = pneg %p227
      $region38: #{tpu_custom_call.1} parent=5 // pred_check_branch
        %230 = sbr.rel (%p228) target = $region40
      $region39: #{tpu_custom_call.1} parent=5 // pred_region
        // Predicated region
        $region41: #{tpu_custom_call.1} parent=39 // pred_check
          %p231 = pneg %p36
        $region42: #{tpu_custom_call.1} parent=39 // pred_check_branch
          %233 = sbr.rel (%p231) target = $region44
        $region43: #{tpu_custom_call.1} parent=39 // pred_region
          %p234 = scmp.lt.s32.totalorder %s16, 1
          %s235 = scalar_select %p234, %s16, 1
          %s236 = smul.addr %s235, 2
          %s237 = smul.addr %s236, 8
          %s238 = scalar_lea.vmem %s0, %s237
        $region44: #{tpu_custom_call.1} parent=39 // pred_fallthru
          _
      $region40: #{tpu_custom_call.1} parent=5 // pred_fallthru
        _
      %p239 = scmp.le.s32.totalorder 1, %s16
      %p240 = scmp.lt.s32.totalorder %s16, 3
      %p241 = pnand %p239, %p240
      %p242 = pneg %p241
      // Predicated region
      $region45: #{tpu_custom_call.1} parent=5 // pred_check
        _
      $region46: #{tpu_custom_call.1} parent=5 // pred_check_branch
        %244 = sbr.rel (%p241) target = $region48
      $region47: #{tpu_custom_call.1} parent=5 // pred_region
        %s245 = ssub.s32 %s16, 1
        %p246 = scmp.lt.s32.totalorder %s21, 1
        %s247 = scalar_select %p246, %s21, 1
        %s248 = smul.addr %s247, 2
        %s249 = smul.addr %s248, 8
        %s250 = scalar_lea.vmem %s0, %s249
        %p251 = pneg %p42
        %p252 = pneg %p39
        %p253 = pneg %p63
        %p254 = pneg %p60
        %p255 = pneg %p84
        %p256 = pneg %p81
        %p257 = pneg %p105
        %p258 = pneg %p102
        %p259 = pneg %p126
        %p260 = pneg %p123
        %p261 = pneg %p147
        %p262 = pneg %p144
        %p263 = pneg %p168
        %p264 = pneg %p165
        %p265 = pneg %p194
        %p266 = pneg %p191
        %s267 = sand.u32 %s181, 1
        %s268 = scalar_lea.sflag [#allocation3], %s267
        %s269 = sand.u32 %s181, 1
        %s270 = smul.addr %s269, 16
        %s271 = scalar_lea.vmem [#allocation2], %s270
        %p272 = scmp.lt.s32.totalorder %s21, 1
        %s273 = scalar_select %p272, %s21, 1
        %s274 = smul.addr %s273, 2
        %s275 = smul.addr %s274, 8
        %s276 = scalar_lea.vmem %s0, %s275
        %v277 = vld [vmem:[%s276] sm:$0xff]
        %v278 = vld [vmem:[%s276 + $0x8] sm:$0xff]
        %v279 = vld [vmem:[%s1] sm:$0x1]
        %v280 = vld [vmem:[%s2] sm:$0x1]
        %281 = vadd.xlane.f32.xlu0 %v277
        %v282 = vpop.xlane.xlu0 %281
        %283 = vadd.xlane.f32.xlu0 %v278
        %v284 = vpop.xlane.xlu0 %283
        %v285 = vrcp.pop 128.0
        %v286 = vmul.f32 %v282, %v285
        %v287 = vmul.f32 %v284, %v285
        %v288 = vsub.f32 %v277, %v286
        %v289 = vsub.f32 %v278, %v287
        %v290 = vmul.f32 %v288, %v288
        %v291 = vmul.f32 %v289, %v289
        %292 = vadd.xlane.f32.xlu0 %v290
        %v293 = vpop.xlane.xlu0 %292
        %294 = vadd.xlane.f32.xlu0 %v291
        %v295 = vpop.xlane.xlu0 %294
        %v296 = vmul.f32 %v293, %v285
        %v297 = vmul.f32 %v295, %v285
        %v298 = vadd.f32 %v296, 1e-05
        %v299 = vadd.f32 %v297, 1e-05
        %v300 = vrsqrt.pop %v298
        %v301 = vrsqrt.pop %v299
        %v302 = vmul.f32 %v288, %v300
        %v303 = vmul.f32 %v289, %v301
        %v305 = vlaneseq
        %v306 = vshrl.u32 %v305, 7
        %v307 = vsub.s32 0, %v306
        %v308 = vrot.slane %v279, %v307
        %v310 = vmul.f32 %v302, %v308
        %v311 = vmul.f32 %v303, %v308
        %v313 = vlaneseq
        %v314 = vshrl.u32 %v313, 7
        %v315 = vsub.s32 0, %v314
        %v316 = vrot.slane %v280, %v315
        %v318 = vadd.f32 %v310, %v316
        %v319 = vadd.f32 %v311, %v316
        %v320 = vld [vmem:[%s3] sm:$0xff]
        %v321 = vld [vmem:[%s3 + $0x8] sm:$0xff]
        %v322 = vld [vmem:[%s3 + $0x10] sm:$0xff]
        %v323 = vld [vmem:[%s3 + $0x18] sm:$0xff]
        %v324 = vld [vmem:[%s3 + $0x20] sm:$0xff]
        %v325 = vld [vmem:[%s3 + $0x28] sm:$0xff]
        %v326 = vld [vmem:[%s3 + $0x30] sm:$0xff]
        %v327 = vld [vmem:[%s3 + $0x38] sm:$0xff]
        %v328 = vld [vmem:[%s3 + $0x40] sm:$0xff]
        %v329 = vld [vmem:[%s3 + $0x48] sm:$0xff]
        %v330 = vld [vmem:[%s3 + $0x50] sm:$0xff]
        %v331 = vld [vmem:[%s3 + $0x58] sm:$0xff]
        %v332 = vld [vmem:[%s3 + $0x60] sm:$0xff]
        %v333 = vld [vmem:[%s3 + $0x68] sm:$0xff]
        %v334 = vld [vmem:[%s3 + $0x70] sm:$0xff]
        %v335 = vld [vmem:[%s3 + $0x78] sm:$0xff]
        %v336 = vld [vmem:[%s4] sm:$0xff]
        %v337 = vld [vmem:[%s4 + $0x8] sm:$0xff]
        %v338 = vld [vmem:[%s4 + $0x10] sm:$0xff]
        %v339 = vld [vmem:[%s4 + $0x18] sm:$0xff]
        %v340 = vld [vmem:[%s4 + $0x20] sm:$0xff]
        %v341 = vld [vmem:[%s4 + $0x28] sm:$0xff]
        %v342 = vld [vmem:[%s4 + $0x30] sm:$0xff]
        %v343 = vld [vmem:[%s4 + $0x38] sm:$0xff]
        %v344 = vld [vmem:[%s4 + $0x40] sm:$0xff]
        %v345 = vld [vmem:[%s4 + $0x48] sm:$0xff]
        %v346 = vld [vmem:[%s4 + $0x50] sm:$0xff]
        %v347 = vld [vmem:[%s4 + $0x58] sm:$0xff]
        %v348 = vld [vmem:[%s4 + $0x60] sm:$0xff]
        %v349 = vld [vmem:[%s4 + $0x68] sm:$0xff]
        %v350 = vld [vmem:[%s4 + $0x70] sm:$0xff]
        %v351 = vld [vmem:[%s4 + $0x78] sm:$0xff]
        %v352 = vld [vmem:[%s5] sm:$0xff]
        %v353 = vld [vmem:[%s5 + $0x8] sm:$0xff]
        %v354 = vld [vmem:[%s5 + $0x10] sm:$0xff]
        %v355 = vld [vmem:[%s5 + $0x18] sm:$0xff]
        %v356 = vld [vmem:[%s5 + $0x20] sm:$0xff]
        %v357 = vld [vmem:[%s5 + $0x28] sm:$0xff]
        %v358 = vld [vmem:[%s5 + $0x30] sm:$0xff]
        %v359 = vld [vmem:[%s5 + $0x38] sm:$0xff]
        %v360 = vld [vmem:[%s5 + $0x40] sm:$0xff]
        %v361 = vld [vmem:[%s5 + $0x48] sm:$0xff]
        %v362 = vld [vmem:[%s5 + $0x50] sm:$0xff]
        %v363 = vld [vmem:[%s5 + $0x58] sm:$0xff]
        %v364 = vld [vmem:[%s5 + $0x60] sm:$0xff]
        %v365 = vld [vmem:[%s5 + $0x68] sm:$0xff]
        %v366 = vld [vmem:[%s5 + $0x70] sm:$0xff]
        %v367 = vld [vmem:[%s5 + $0x78] sm:$0xff]
        %v368 = vld [vmem:[%s6] sm:$0xff]
        %v369 = vld [vmem:[%s6 + $0x8] sm:$0xff]
        %v370 = vld [vmem:[%s6 + $0x10] sm:$0xff]
        %v371 = vld [vmem:[%s6 + $0x18] sm:$0xff]
        %v372 = vld [vmem:[%s6 + $0x20] sm:$0xff]
        %v373 = vld [vmem:[%s6 + $0x28] sm:$0xff]
        %v374 = vld [vmem:[%s6 + $0x30] sm:$0xff]
        %v375 = vld [vmem:[%s6 + $0x38] sm:$0xff]
        %v376 = vld [vmem:[%s6 + $0x40] sm:$0xff]
        %v377 = vld [vmem:[%s6 + $0x48] sm:$0xff]
        %v378 = vld [vmem:[%s6 + $0x50] sm:$0xff]
        %v379 = vld [vmem:[%s6 + $0x58] sm:$0xff]
        %v380 = vld [vmem:[%s6 + $0x60] sm:$0xff]
        %v381 = vld [vmem:[%s6 + $0x68] sm:$0xff]
        %v382 = vld [vmem:[%s6 + $0x70] sm:$0xff]
        %v383 = vld [vmem:[%s6 + $0x78] sm:$0xff]
        %384 = vmatprep.subr.mxu0 0.0
        %385 = vmatpush1.msra.mxu0 %v320
        %386 = vmatprep.subr.mxu0 0.0
        %387 = vmatpush1.msra.mxu0 %v321
        %388 = vmatprep.subr.mxu0 0.0
        %389 = vmatpush1.msra.mxu0 %v322
        %390 = vmatprep.subr.mxu0 0.0
        %391 = vmatpush1.msra.mxu0 %v323
        %392 = vmatprep.subr.mxu0 0.0
        %393 = vmatpush1.msra.mxu0 %v324
        %394 = vmatprep.subr.mxu0 0.0
        %395 = vmatpush1.msra.mxu0 %v325
        %396 = vmatprep.subr.mxu0 0.0
        %397 = vmatpush1.msra.mxu0 %v326
        %398 = vmatprep.subr.mxu0 0.0
        %399 = vmatpush1.msra.mxu0 %v327
        %400 = vmatprep.subr.mxu0 0.0
        %401 = vmatpush1.msra.mxu0 %v328
        %402 = vmatprep.subr.mxu0 0.0
        %403 = vmatpush1.msra.mxu0 %v329
        %404 = vmatprep.subr.mxu0 0.0
        %405 = vmatpush1.msra.mxu0 %v330
        %406 = vmatprep.subr.mxu0 0.0
        %407 = vmatpush1.msra.mxu0 %v331
        %408 = vmatprep.subr.mxu0 0.0
        %409 = vmatpush1.msra.mxu0 %v332
        %410 = vmatprep.subr.mxu0 0.0
        %411 = vmatpush1.msra.mxu0 %v333
        %412 = vmatprep.subr.mxu0 0.0
        %413 = vmatpush1.msra.mxu0 %v334
        %414 = vmatprep.subr.mxu0 0.0
        %415 = vmatpush1.msra.mxu0 %v335
        %416 = vmatprep.subr.mxu0 0.0
        %417 = vmatpush1.msra.mxu0 0.0
        %418 = vmatprep.subr.mxu0 0.0
        %419 = vmatpush1.msra.mxu0 0.0
        %420 = vmatprep.subr.mxu0 0.0
        %421 = vmatpush1.msra.mxu0 0.0
        %422 = vmatprep.subr.mxu0 0.0
        %423 = vmatpush1.msra.mxu0 0.0
        %424 = vmatprep.subr.mxu0 0.0
        %425 = vmatpush1.msra.mxu0 0.0
        %426 = vmatprep.subr.mxu0 0.0
        %427 = vmatpush1.msra.mxu0 0.0
        %428 = vmatprep.subr.mxu0 0.0
        %429 = vmatpush1.msra.mxu0 0.0
        %430 = vmatprep.subr.mxu0 0.0
        %431 = vmatpush1.msra.mxu0 0.0
        %432 = vmatprep.subr.mxu0 0.0
        %433 = vmatpush1.msra.mxu0 0.0
        %434 = vmatprep.subr.mxu0 0.0
        %435 = vmatpush1.msra.mxu0 0.0
        %436 = vmatprep.subr.mxu0 0.0
        %437 = vmatpush1.msra.mxu0 0.0
        %438 = vmatprep.subr.mxu0 0.0
        %439 = vmatpush1.msra.mxu0 0.0
        %440 = vmatprep.subr.mxu0 0.0
        %441 = vmatpush1.msra.mxu0 0.0
        %442 = vmatprep.subr.mxu0 0.0
        %443 = vmatpush1.msra.mxu0 0.0
        %444 = vmatprep.subr.mxu0 0.0
        %445 = vmatpush1.msra.mxu0 0.0
        %446 = vmatprep.subr.mxu0 0.0
        %447 = vmatpush1.msra.mxu0 0.0
        %448 = vmatprep.mubr.f32.mxu0 0.0
        %449 = vmatmul.mubr.f32.gmra.mrb[0].mxu0 %v318
        %v450 = vpop.f32.mrb[0].mxu0
        %v451 = vadd.f32 0.0, %v450
        %v452 = vpop.f32.mrb[0].mxu0
        %453 = vmatprep.mubr.f32.mxu0 0.0
        %454 = vmatmul.mubr.f32.gmra.mrb[0].mxu0 %v319
        %v455 = vpop.f32.mrb[0].mxu0
        %v456 = vadd.f32 0.0, %v455
        %v457 = vpop.f32.mrb[0].mxu0
        %458 = vdwg.mxu0
        %v459 = vmul.f32 %v451, 0.17677669
        %v460 = vmul.f32 %v456, 0.17677669
        %461 = vmatprep.subr.mxu0 0.0
        %462 = vmatpush1.msra.mxu0 %v336
        %463 = vmatprep.subr.mxu0 0.0
        %464 = vmatpush1.msra.mxu0 %v337
        %465 = vmatprep.subr.mxu0 0.0
        %466 = vmatpush1.msra.mxu0 %v338
        %467 = vmatprep.subr.mxu0 0.0
        %468 = vmatpush1.msra.mxu0 %v339
        %469 = vmatprep.subr.mxu0 0.0
        %470 = vmatpush1.msra.mxu0 %v340
        %471 = vmatprep.subr.mxu0 0.0
        %472 = vmatpush1.msra.mxu0 %v341
        %473 = vmatprep.subr.mxu0 0.0
        %474 = vmatpush1.msra.mxu0 %v342
        %475 = vmatprep.subr.mxu0 0.0
        %476 = vmatpush1.msra.mxu0 %v343
        %477 = vmatprep.subr.mxu0 0.0
        %478 = vmatpush1.msra.mxu0 %v344
        %479 = vmatprep.subr.mxu0 0.0
        %480 = vmatpush1.msra.mxu0 %v345
        %481 = vmatprep.subr.mxu0 0.0
        %482 = vmatpush1.msra.mxu0 %v346
        %483 = vmatprep.subr.mxu0 0.0
        %484 = vmatpush1.msra.mxu0 %v347
        %485 = vmatprep.subr.mxu0 0.0
        %486 = vmatpush1.msra.mxu0 %v348
        %487 = vmatprep.subr.mxu0 0.0
        %488 = vmatpush1.msra.mxu0 %v349
        %489 = vmatprep.subr.mxu0 0.0
        %490 = vmatpush1.msra.mxu0 %v350
        %491 = vmatprep.subr.mxu0 0.0
        %492 = vmatpush1.msra.mxu0 %v351
        %493 = vmatprep.subr.mxu0 0.0
        %494 = vmatpush1.msra.mxu0 0.0
        %495 = vmatprep.subr.mxu0 0.0
        %496 = vmatpush1.msra.mxu0 0.0
        %497 = vmatprep.subr.mxu0 0.0
        %498 = vmatpush1.msra.mxu0 0.0
        %499 = vmatprep.subr.mxu0 0.0
        %500 = vmatpush1.msra.mxu0 0.0
        %501 = vmatprep.subr.mxu0 0.0
        %502 = vmatpush1.msra.mxu0 0.0
        %503 = vmatprep.subr.mxu0 0.0
        %504 = vmatpush1.msra.mxu0 0.0
        %505 = vmatprep.subr.mxu0 0.0
        %506 = vmatpush1.msra.mxu0 0.0
        %507 = vmatprep.subr.mxu0 0.0
        %508 = vmatpush1.msra.mxu0 0.0
        %509 = vmatprep.subr.mxu0 0.0
        %510 = vmatpush1.msra.mxu0 0.0
        %511 = vmatprep.subr.mxu0 0.0
        %512 = vmatpush1.msra.mxu0 0.0
        %513 = vmatprep.subr.mxu0 0.0
        %514 = vmatpush1.msra.mxu0 0.0
        %515 = vmatprep.subr.mxu0 0.0
        %516 = vmatpush1.msra.mxu0 0.0
        %517 = vmatprep.subr.mxu0 0.0
        %518 = vmatpush1.msra.mxu0 0.0
        %519 = vmatprep.subr.mxu0 0.0
        %520 = vmatpush1.msra.mxu0 0.0
        %521 = vmatprep.subr.mxu0 0.0
        %522 = vmatpush1.msra.mxu0 0.0
        %523 = vmatprep.subr.mxu0 0.0
        %524 = vmatpush1.msra.mxu0 0.0
        %525 = vmatprep.mubr.f32.mxu0 0.0
        %526 = vmatmul.mubr.f32.gmra.mrb[0].mxu0 %v277
        %v527 = vpop.f32.mrb[0].mxu0
        %v528 = vadd.f32 0.0, %v527
        %v529 = vpop.f32.mrb[0].mxu0
        %530 = vmatprep.mubr.f32.mxu0 0.0
        %531 = vmatmul.mubr.f32.gmra.mrb[0].mxu0 %v278
        %v532 = vpop.f32.mrb[0].mxu0
        %v533 = vadd.f32 0.0, %v532
        %v534 = vpop.f32.mrb[0].mxu0
        %535 = vdwg.mxu0
        %536 = vmatprep.subr.mxu0 0.0
        %537 = vmatpush1.msra.mxu0 %v352
        %538 = vmatprep.subr.mxu0 0.0
        %539 = vmatpush1.msra.mxu0 %v353
        %540 = vmatprep.subr.mxu0 0.0
        %541 = vmatpush1.msra.mxu0 %v354
        %542 = vmatprep.subr.mxu0 0.0
        %543 = vmatpush1.msra.mxu0 %v355
        %544 = vmatprep.subr.mxu0 0.0
        %545 = vmatpush1.msra.mxu0 %v356
        %546 = vmatprep.subr.mxu0 0.0
        %547 = vmatpush1.msra.mxu0 %v357
        %548 = vmatprep.subr.mxu0 0.0
        %549 = vmatpush1.msra.mxu0 %v358
        %550 = vmatprep.subr.mxu0 0.0
        %551 = vmatpush1.msra.mxu0 %v359
        %552 = vmatprep.subr.mxu0 0.0
        %553 = vmatpush1.msra.mxu0 %v360
        %554 = vmatprep.subr.mxu0 0.0
        %555 = vmatpush1.msra.mxu0 %v361
        %556 = vmatprep.subr.mxu0 0.0
        %557 = vmatpush1.msra.mxu0 %v362
        %558 = vmatprep.subr.mxu0 0.0
        %559 = vmatpush1.msra.mxu0 %v363
        %560 = vmatprep.subr.mxu0 0.0
        %561 = vmatpush1.msra.mxu0 %v364
        %562 = vmatprep.subr.mxu0 0.0
        %563 = vmatpush1.msra.mxu0 %v365
        %564 = vmatprep.subr.mxu0 0.0
        %565 = vmatpush1.msra.mxu0 %v366
        %566 = vmatprep.subr.mxu0 0.0
        %567 = vmatpush1.msra.mxu0 %v367
        %568 = vmatprep.subr.mxu0 0.0
        %569 = vmatpush1.msra.mxu0 0.0
        %570 = vmatprep.subr.mxu0 0.0
        %571 = vmatpush1.msra.mxu0 0.0
        %572 = vmatprep.subr.mxu0 0.0
        %573 = vmatpush1.msra.mxu0 0.0
        %574 = vmatprep.subr.mxu0 0.0
        %575 = vmatpush1.msra.mxu0 0.0
        %576 = vmatprep.subr.mxu0 0.0
        %577 = vmatpush1.msra.mxu0 0.0
        %578 = vmatprep.subr.mxu0 0.0
        %579 = vmatpush1.msra.mxu0 0.0
        %580 = vmatprep.subr.mxu0 0.0
        %581 = vmatpush1.msra.mxu0 0.0
        %582 = vmatprep.subr.mxu0 0.0
        %583 = vmatpush1.msra.mxu0 0.0
        %584 = vmatprep.subr.mxu0 0.0
        %585 = vmatpush1.msra.mxu0 0.0
        %586 = vmatprep.subr.mxu0 0.0
        %587 = vmatpush1.msra.mxu0 0.0
        %588 = vmatprep.subr.mxu0 0.0
        %589 = vmatpush1.msra.mxu0 0.0
        %590 = vmatprep.subr.mxu0 0.0
        %591 = vmatpush1.msra.mxu0 0.0
        %592 = vmatprep.subr.mxu0 0.0
        %593 = vmatpush1.msra.mxu0 0.0
        %594 = vmatprep.subr.mxu0 0.0
        %595 = vmatpush1.msra.mxu0 0.0
        %596 = vmatprep.subr.mxu0 0.0
        %597 = vmatpush1.msra.mxu0 0.0
        %598 = vmatprep.subr.mxu0 0.0
        %599 = vmatpush1.msra.mxu0 0.0
        %600 = vmatprep.mubr.f32.mxu0 0.0
        %601 = vmatmul.mubr.f32.gmra.mrb[0].mxu0 %v277
        %v602 = vpop.f32.mrb[0].mxu0
        %v603 = vadd.f32 0.0, %v602
        %v604 = vpop.f32.mrb[0].mxu0
        %605 = vmatprep.mubr.f32.mxu0 0.0
        %606 = vmatmul.mubr.f32.gmra.mrb[0].mxu0 %v278
        %v607 = vpop.f32.mrb[0].mxu0
        %v608 = vadd.f32 0.0, %v607
        %v609 = vpop.f32.mrb[0].mxu0
        %610 = vdwg.mxu0
        %vm611 = vcmask 261120
        %v613 = vsel %vm611, %v459, 0
        %v616 = vsel %vm611, %v460, 0
        %v619 = vsel %vm611, %v528, 0
        %v622 = vsel %vm611, %v533, 0
        %624 = vmatprep.subr.mxu0 0.0
        %625 = vmatpush1.xpose.msra.mxu0 %v619
        %626 = vmatprep.subr.mxu0 0.0
        %627 = vmatpush1.xpose.msra.mxu0 %v622
        %628 = vmatprep.subr.mxu0 0.0
        %629 = vmatpush1.xpose.msra.mxu0 0.0
        %630 = vmatprep.subr.mxu0 0.0
        %631 = vmatpush1.xpose.msra.mxu0 0.0
        %632 = vmatprep.subr.mxu0 0.0
        %633 = vmatpush1.xpose.msra.mxu0 0.0
        %634 = vmatprep.subr.mxu0 0.0
        %635 = vmatpush1.xpose.msra.mxu0 0.0
        %636 = vmatprep.subr.mxu0 0.0
        %637 = vmatpush1.xpose.msra.mxu0 0.0
        %638 = vmatprep.subr.mxu0 0.0
        %639 = vmatpush1.xpose.msra.mxu0 0.0
        %640 = vmatprep.subr.mxu0 0.0
        %641 = vmatpush1.xpose.msra.mxu0 0.0
        %642 = vmatprep.subr.mxu0 0.0
        %643 = vmatpush1.xpose.msra.mxu0 0.0
        %644 = vmatprep.subr.mxu0 0.0
        %645 = vmatpush1.xpose.msra.mxu0 0.0
        %646 = vmatprep.subr.mxu0 0.0
        %647 = vmatpush1.xpose.msra.mxu0 0.0
        %648 = vmatprep.subr.mxu0 0.0
        %649 = vmatpush1.xpose.msra.mxu0 0.0
        %650 = vmatprep.subr.mxu0 0.0
        %651 = vmatpush1.xpose.msra.mxu0 0.0
        %652 = vmatprep.subr.mxu0 0.0
        %653 = vmatpush1.xpose.msra.mxu0 0.0
        %654 = vmatprep.subr.mxu0 0.0
        %655 = vmatpush1.xpose.msra.mxu0 0.0
        %656 = vmatprep.subr.mxu0 0.0
        %657 = vmatpush1.xpose.msra.mxu0 0.0
        %658 = vmatprep.subr.mxu0 0.0
        %659 = vmatpush1.xpose.msra.mxu0 0.0
        %660 = vmatprep.subr.mxu0 0.0
        %661 = vmatpush1.xpose.msra.mxu0 0.0
        %662 = vmatprep.subr.mxu0 0.0
        %663 = vmatpush1.xpose.msra.mxu0 0.0
        %664 = vmatprep.subr.mxu0 0.0
        %665 = vmatpush1.xpose.msra.mxu0 0.0
        %666 = vmatprep.subr.mxu0 0.0
        %667 = vmatpush1.xpose.msra.mxu0 0.0
        %668 = vmatprep.subr.mxu0 0.0
        %669 = vmatpush1.xpose.msra.mxu0 0.0
        %670 = vmatprep.subr.mxu0 0.0
        %671 = vmatpush1.xpose.msra.mxu0 0.0
        %672 = vmatprep.subr.mxu0 0.0
        %673 = vmatpush1.xpose.msra.mxu0 0.0
        %674 = vmatprep.subr.mxu0 0.0
        %675 = vmatpush1.xpose.msra.mxu0 0.0
        %676 = vmatprep.subr.mxu0 0.0
        %677 = vmatpush1.xpose.msra.mxu0 0.0
        %678 = vmatprep.subr.mxu0 0.0
        %679 = vmatpush1.xpose.msra.mxu0 0.0
        %680 = vmatprep.subr.mxu0 0.0
        %681 = vmatpush1.xpose.msra.mxu0 0.0
        %682 = vmatprep.subr.mxu0 0.0
        %683 = vmatpush1.xpose.msra.mxu0 0.0
        %684 = vmatprep.subr.mxu0 0.0
        %685 = vmatpush1.xpose.msra.mxu0 0.0
        %686 = vmatprep.subr.mxu0 0.0
        %687 = vmatpush1.xpose.msra.mxu0 0.0
        %688 = vmatprep.mubr.f32.mxu0 0.0
        %689 = vmatmul.mubr.f32.gmra.mrb[0].mxu0 %v613
        %v690 = vpop.f32.mrb[0].mxu0
        %v691 = vadd.f32 0.0, %v690
        %v692 = vpop.f32.mrb[0].mxu0
        %693 = vmatprep.mubr.f32.mxu0 0.0
        %694 = vmatmul.mubr.f32.gmra.mrb[0].mxu0 %v616
        %v695 = vpop.f32.mrb[0].mxu0
        %v696 = vadd.f32 0.0, %v695
        %v697 = vpop.f32.mrb[0].mxu0
        %698 = vdwg.mxu0
        %vm699 = vcmask 130048
        %v700 = vsel %vm699, %v691, -inf
        %701 = vmax.xlane.f32.xlu0 %v700
        %v702 = vpop.xlane.xlu0 %701
        %v703 = vsel %vm699, %v696, -inf
        %704 = vmax.xlane.f32.xlu0 %v703
        %v705 = vpop.xlane.xlu0 %704
        %v706 = vsub.f32 %v691, %v702
        %v707 = vsub.f32 %v696, %v705
        %v708 = vmul.f32 %v706, 1.442695
        %v709 = vpow.pop %v708
        %v710 = vmul.f32 %v707, 1.442695
        %v711 = vpow.pop %v710
        %v712 = vsel %vm699, %v709, 0.0
        %713 = vadd.xlane.f32.xlu0 %v712
        %v714 = vpop.xlane.xlu0 %713
        %v715 = vsel %vm699, %v711, 0.0
        %716 = vadd.xlane.f32.xlu0 %v715
        %v717 = vpop.xlane.xlu0 %716
        %v718 = vrcp.pop %v714
        %v719 = vmul.f32 %v709, %v718
        %v720 = vrcp.pop %v717
        %v721 = vmul.f32 %v711, %v720
        %v723 = vsel %vm699, %v719, 0
        %v726 = vsel %vm699, %v721, 0
        %728 = vmatprep.subr.mxu0 0.0
        %729 = vmatpush1.msra.mxu0 %v603
        %730 = vmatprep.subr.mxu0 0.0
        %731 = vmatpush1.msra.mxu0 %v608
        %732 = vmatprep.subr.mxu0 0.0
        %733 = vmatpush1.msra.mxu0 0.0
        %734 = vmatprep.subr.mxu0 0.0
        %735 = vmatpush1.msra.mxu0 0.0
        %736 = vmatprep.subr.mxu0 0.0
        %737 = vmatpush1.msra.mxu0 0.0
        %738 = vmatprep.subr.mxu0 0.0
        %739 = vmatpush1.msra.mxu0 0.0
        %740 = vmatprep.subr.mxu0 0.0
        %741 = vmatpush1.msra.mxu0 0.0
        %742 = vmatprep.subr.mxu0 0.0
        %743 = vmatpush1.msra.mxu0 0.0
        %744 = vmatprep.subr.mxu0 0.0
        %745 = vmatpush1.msra.mxu0 0.0
        %746 = vmatprep.subr.mxu0 0.0
        %747 = vmatpush1.msra.mxu0 0.0
        %748 = vmatprep.subr.mxu0 0.0
        %749 = vmatpush1.msra.mxu0 0.0
        %750 = vmatprep.subr.mxu0 0.0
        %751 = vmatpush1.msra.mxu0 0.0
        %752 = vmatprep.subr.mxu0 0.0
        %753 = vmatpush1.msra.mxu0 0.0
        %754 = vmatprep.subr.mxu0 0.0
        %755 = vmatpush1.msra.mxu0 0.0
        %756 = vmatprep.subr.mxu0 0.0
        %757 = vmatpush1.msra.mxu0 0.0
        %758 = vmatprep.subr.mxu0 0.0
        %759 = vmatpush1.msra.mxu0 0.0
        %760 = vmatprep.subr.mxu0 0.0
        %761 = vmatpush1.msra.mxu0 0.0
        %762 = vmatprep.subr.mxu0 0.0
        %763 = vmatpush1.msra.mxu0 0.0
        %764 = vmatprep.subr.mxu0 0.0
        %765 = vmatpush1.msra.mxu0 0.0
        %766 = vmatprep.subr.mxu0 0.0
        %767 = vmatpush1.msra.mxu0 0.0
        %768 = vmatprep.subr.mxu0 0.0
        %769 = vmatpush1.msra.mxu0 0.0
        %770 = vmatprep.subr.mxu0 0.0
        %771 = vmatpush1.msra.mxu0 0.0
        %772 = vmatprep.subr.mxu0 0.0
        %773 = vmatpush1.msra.mxu0 0.0
        %774 = vmatprep.subr.mxu0 0.0
        %775 = vmatpush1.msra.mxu0 0.0
        %776 = vmatprep.subr.mxu0 0.0
        %777 = vmatpush1.msra.mxu0 0.0
        %778 = vmatprep.subr.mxu0 0.0
        %779 = vmatpush1.msra.mxu0 0.0
        %780 = vmatprep.subr.mxu0 0.0
        %781 = vmatpush1.msra.mxu0 0.0
        %782 = vmatprep.subr.mxu0 0.0
        %783 = vmatpush1.msra.mxu0 0.0
        %784 = vmatprep.subr.mxu0 0.0
        %785 = vmatpush1.msra.mxu0 0.0
        %786 = vmatprep.subr.mxu0 0.0
        %787 = vmatpush1.msra.mxu0 0.0
        %788 = vmatprep.subr.mxu0 0.0
        %789 = vmatpush1.msra.mxu0 0.0
        %790 = vmatprep.subr.mxu0 0.0
        %791 = vmatpush1.msra.mxu0 0.0
        %792 = vmatprep.mubr.f32.mxu0 0.0
        %793 = vmatmul.mubr.f32.gmra.mrb[0].mxu0 %v723
        %v794 = vpop.f32.mrb[0].mxu0
        %v795 = vadd.f32 0.0, %v794
        %v796 = vpop.f32.mrb[0].mxu0
        %797 = vmatprep.mubr.f32.mxu0 0.0
        %798 = vmatmul.mubr.f32.gmra.mrb[0].mxu0 %v726
        %v799 = vpop.f32.mrb[0].mxu0
        %v800 = vadd.f32 0.0, %v799
        %v801 = vpop.f32.mrb[0].mxu0
        %802 = vdwg.mxu0
        %803 = vrot.lane.b32.xlu0 %v459, 96
        %v804 = vpop.permute.xlu0 %803
        %805 = vrot.lane.b32.xlu0 %v460, 96
        %v806 = vpop.permute.xlu0 %805
        %v807 = vsel %vm611, %v804, 0
        %v809 = vsel %vm611, %v806, 0
        %811 = vmatprep.subr.mxu0 0.0
        %812 = vmatpush1.xpose.msra.mxu0 %v619
        %813 = vmatprep.subr.mxu0 0.0
        %814 = vmatpush1.xpose.msra.mxu0 %v622
        %815 = vmatprep.subr.mxu0 0.0
        %816 = vmatpush1.xpose.msra.mxu0 0.0
        %817 = vmatprep.subr.mxu0 0.0
        %818 = vmatpush1.xpose.msra.mxu0 0.0
        %819 = vmatprep.subr.mxu0 0.0
        %820 = vmatpush1.xpose.msra.mxu0 0.0
        %821 = vmatprep.subr.mxu0 0.0
        %822 = vmatpush1.xpose.msra.mxu0 0.0
        %823 = vmatprep.subr.mxu0 0.0
        %824 = vmatpush1.xpose.msra.mxu0 0.0
        %825 = vmatprep.subr.mxu0 0.0
        %826 = vmatpush1.xpose.msra.mxu0 0.0
        %827 = vmatprep.subr.mxu0 0.0
        %828 = vmatpush1.xpose.msra.mxu0 0.0
        %829 = vmatprep.subr.mxu0 0.0
        %830 = vmatpush1.xpose.msra.mxu0 0.0
        %831 = vmatprep.subr.mxu0 0.0
        %832 = vmatpush1.xpose.msra.mxu0 0.0
        %833 = vmatprep.subr.mxu0 0.0
        %834 = vmatpush1.xpose.msra.mxu0 0.0
        %835 = vmatprep.subr.mxu0 0.0
        %836 = vmatpush1.xpose.msra.mxu0 0.0
        %837 = vmatprep.subr.mxu0 0.0
        %838 = vmatpush1.xpose.msra.mxu0 0.0
        %839 = vmatprep.subr.mxu0 0.0
        %840 = vmatpush1.xpose.msra.mxu0 0.0
        %841 = vmatprep.subr.mxu0 0.0
        %842 = vmatpush1.xpose.msra.mxu0 0.0
        %843 = vmatprep.subr.mxu0 0.0
        %844 = vmatpush1.xpose.msra.mxu0 0.0
        %845 = vmatprep.subr.mxu0 0.0
        %846 = vmatpush1.xpose.msra.mxu0 0.0
        %847 = vmatprep.subr.mxu0 0.0
        %848 = vmatpush1.xpose.msra.mxu0 0.0
        %849 = vmatprep.subr.mxu0 0.0
        %850 = vmatpush1.xpose.msra.mxu0 0.0
        %851 = vmatprep.subr.mxu0 0.0
        %852 = vmatpush1.xpose.msra.mxu0 0.0
        %853 = vmatprep.subr.mxu0 0.0
        %854 = vmatpush1.xpose.msra.mxu0 0.0
        %855 = vmatprep.subr.mxu0 0.0
        %856 = vmatpush1.xpose.msra.mxu0 0.0
        %857 = vmatprep.subr.mxu0 0.0
        %858 = vmatpush1.xpose.msra.mxu0 0.0
        %859 = vmatprep.subr.mxu0 0.0
        %860 = vmatpush1.xpose.msra.mxu0 0.0
        %861 = vmatprep.subr.mxu0 0.0
        %862 = vmatpush1.xpose.msra.mxu0 0.0
        %863 = vmatprep.subr.mxu0 0.0
        %864 = vmatpush1.xpose.msra.mxu0 0.0
        %865 = vmatprep.subr.mxu0 0.0
        %866 = vmatpush1.xpose.msra.mxu0 0.0
        %867 = vmatprep.subr.mxu0 0.0
        %868 = vmatpush1.xpose.msra.mxu0 0.0
        %869 = vmatprep.subr.mxu0 0.0
        %870 = vmatpush1.xpose.msra.mxu0 0.0
        %871 = vmatprep.subr.mxu0 0.0
        %872 = vmatpush1.xpose.msra.mxu0 0.0
        %873 = vmatprep.subr.mxu0 0.0
        %874 = vmatpush1.xpose.msra.mxu0 0.0
        %875 = vmatprep.mubr.f32.mxu0 0.0
        %876 = vmatmul.mubr.f32.gmra.mrb[0].mxu0 %v807
        %v877 = vpop.f32.mrb[0].mxu0
        %v878 = vadd.f32 0.0, %v877
        %v879 = vpop.f32.mrb[0].mxu0
        %880 = vmatprep.mubr.f32.mxu0 0.0
        %881 = vmatmul.mubr.f32.gmra.mrb[0].mxu0 %v809
        %v882 = vpop.f32.mrb[0].mxu0
        %v883 = vadd.f32 0.0, %v882
        %v884 = vpop.f32.mrb[0].mxu0
        %885 = vdwg.mxu0
        %v886 = vsel %vm699, %v878, -inf
        %887 = vmax.xlane.f32.xlu0 %v886
        %v888 = vpop.xlane.xlu0 %887
        %v889 = vsel %vm699, %v883, -inf
        %890 = vmax.xlane.f32.xlu0 %v889
        %v891 = vpop.xlane.xlu0 %890
        %v892 = vsub.f32 %v878, %v888
        %v893 = vsub.f32 %v883, %v891
        %v894 = vmul.f32 %v892, 1.442695
        %v895 = vpow.pop %v894
        %v896 = vmul.f32 %v893, 1.442695
        %v897 = vpow.pop %v896
        %v898 = vsel %vm699, %v895, 0.0
        %899 = vadd.xlane.f32.xlu0 %v898
        %v900 = vpop.xlane.xlu0 %899
        %v901 = vsel %vm699, %v897, 0.0
        %902 = vadd.xlane.f32.xlu0 %v901
        %v903 = vpop.xlane.xlu0 %902
        %v904 = vrcp.pop %v900
        %v905 = vmul.f32 %v895, %v904
        %v906 = vrcp.pop %v903
        %v907 = vmul.f32 %v897, %v906
        %v909 = vsel %vm699, %v905, 0
        %v912 = vsel %vm699, %v907, 0
        %914 = vmatprep.subr.mxu0 0.0
        %915 = vmatpush1.msra.mxu0 %v603
        %916 = vmatprep.subr.mxu0 0.0
        %917 = vmatpush1.msra.mxu0 %v608
        %918 = vmatprep.subr.mxu0 0.0
        %919 = vmatpush1.msra.mxu0 0.0
        %920 = vmatprep.subr.mxu0 0.0
        %921 = vmatpush1.msra.mxu0 0.0
        %922 = vmatprep.subr.mxu0 0.0
        %923 = vmatpush1.msra.mxu0 0.0
        %924 = vmatprep.subr.mxu0 0.0
        %925 = vmatpush1.msra.mxu0 0.0
        %926 = vmatprep.subr.mxu0 0.0
        %927 = vmatpush1.msra.mxu0 0.0
        %928 = vmatprep.subr.mxu0 0.0
        %929 = vmatpush1.msra.mxu0 0.0
        %930 = vmatprep.subr.mxu0 0.0
        %931 = vmatpush1.msra.mxu0 0.0
        %932 = vmatprep.subr.mxu0 0.0
        %933 = vmatpush1.msra.mxu0 0.0
        %934 = vmatprep.subr.mxu0 0.0
        %935 = vmatpush1.msra.mxu0 0.0
        %936 = vmatprep.subr.mxu0 0.0
        %937 = vmatpush1.msra.mxu0 0.0
        %938 = vmatprep.subr.mxu0 0.0
        %939 = vmatpush1.msra.mxu0 0.0
        %940 = vmatprep.subr.mxu0 0.0
        %941 = vmatpush1.msra.mxu0 0.0
        %942 = vmatprep.subr.mxu0 0.0
        %943 = vmatpush1.msra.mxu0 0.0
        %944 = vmatprep.subr.mxu0 0.0
        %945 = vmatpush1.msra.mxu0 0.0
        %946 = vmatprep.subr.mxu0 0.0
        %947 = vmatpush1.msra.mxu0 0.0
        %948 = vmatprep.subr.mxu0 0.0
        %949 = vmatpush1.msra.mxu0 0.0
        %950 = vmatprep.subr.mxu0 0.0
        %951 = vmatpush1.msra.mxu0 0.0
        %952 = vmatprep.subr.mxu0 0.0
        %953 = vmatpush1.msra.mxu0 0.0
        %954 = vmatprep.subr.mxu0 0.0
        %955 = vmatpush1.msra.mxu0 0.0
        %956 = vmatprep.subr.mxu0 0.0
        %957 = vmatpush1.msra.mxu0 0.0
        %958 = vmatprep.subr.mxu0 0.0
        %959 = vmatpush1.msra.mxu0 0.0
        %960 = vmatprep.subr.mxu0 0.0
        %961 = vmatpush1.msra.mxu0 0.0
        %962 = vmatprep.subr.mxu0 0.0
        %963 = vmatpush1.msra.mxu0 0.0
        %964 = vmatprep.subr.mxu0 0.0
        %965 = vmatpush1.msra.mxu0 0.0
        %966 = vmatprep.subr.mxu0 0.0
        %967 = vmatpush1.msra.mxu0 0.0
        %968 = vmatprep.subr.mxu0 0.0
        %969 = vmatpush1.msra.mxu0 0.0
        %970 = vmatprep.subr.mxu0 0.0
        %971 = vmatpush1.msra.mxu0 0.0
        %972 = vmatprep.subr.mxu0 0.0
        %973 = vmatpush1.msra.mxu0 0.0
        %974 = vmatprep.subr.mxu0 0.0
        %975 = vmatpush1.msra.mxu0 0.0
        %976 = vmatprep.subr.mxu0 0.0
        %977 = vmatpush1.msra.mxu0 0.0
        %978 = vmatprep.mubr.f32.mxu0 0.0
        %979 = vmatmul.mubr.f32.gmra.mrb[0].mxu0 %v909
        %v980 = vpop.f32.mrb[0].mxu0
        %v981 = vadd.f32 0.0, %v980
        %v982 = vpop.f32.mrb[0].mxu0
        %983 = vmatprep.mubr.f32.mxu0 0.0
        %984 = vmatmul.mubr.f32.gmra.mrb[0].mxu0 %v912
        %v985 = vpop.f32.mrb[0].mxu0
        %v986 = vadd.f32 0.0, %v985
        %v987 = vpop.f32.mrb[0].mxu0
        %988 = vdwg.mxu0
        %v990 = vsel %vm611, %v981, 0
        %v993 = vsel %vm611, %v986, 0
        %995 = vmatprep.subr.mxu0 0.0
        %996 = vmatpush1.msra.mxu0 %v372
        %997 = vmatprep.subr.mxu0 0.0
        %998 = vmatpush1.msra.mxu0 %v373
        %999 = vmatprep.subr.mxu0 0.0
        %1000 = vmatpush1.msra.mxu0 %v374
        %1001 = vmatprep.subr.mxu0 0.0
        %1002 = vmatpush1.msra.mxu0 %v375
        %1003 = vmatprep.subr.mxu0 0.0
        %1004 = vmatpush1.msra.mxu0 0.0
        %1005 = vmatprep.subr.mxu0 0.0
        %1006 = vmatpush1.msra.mxu0 0.0
        %1007 = vmatprep.subr.mxu0 0.0
        %1008 = vmatpush1.msra.mxu0 0.0
        %1009 = vmatprep.subr.mxu0 0.0
        %1010 = vmatpush1.msra.mxu0 0.0
        %1011 = vmatprep.subr.mxu0 0.0
        %1012 = vmatpush1.msra.mxu0 0.0
        %1013 = vmatprep.subr.mxu0 0.0
        %1014 = vmatpush1.msra.mxu0 0.0
        %1015 = vmatprep.subr.mxu0 0.0
        %1016 = vmatpush1.msra.mxu0 0.0
        %1017 = vmatprep.subr.mxu0 0.0
        %1018 = vmatpush1.msra.mxu0 0.0
        %1019 = vmatprep.subr.mxu0 0.0
        %1020 = vmatpush1.msra.mxu0 0.0
        %1021 = vmatprep.subr.mxu0 0.0
        %1022 = vmatpush1.msra.mxu0 0.0
        %1023 = vmatprep.subr.mxu0 0.0
        %1024 = vmatpush1.msra.mxu0 0.0
        %1025 = vmatprep.subr.mxu0 0.0
        %1026 = vmatpush1.msra.mxu0 0.0
        %1027 = vmatprep.subr.mxu0 0.0
        %1028 = vmatpush1.msra.mxu0 0.0
        %1029 = vmatprep.subr.mxu0 0.0
        %1030 = vmatpush1.msra.mxu0 0.0
        %1031 = vmatprep.subr.mxu0 0.0
        %1032 = vmatpush1.msra.mxu0 0.0
        %1033 = vmatprep.subr.mxu0 0.0
        %1034 = vmatpush1.msra.mxu0 0.0
        %1035 = vmatprep.subr.mxu0 0.0
        %1036 = vmatpush1.msra.mxu0 0.0
        %1037 = vmatprep.subr.mxu0 0.0
        %1038 = vmatpush1.msra.mxu0 0.0
        %1039 = vmatprep.subr.mxu0 0.0
        %1040 = vmatpush1.msra.mxu0 0.0
        %1041 = vmatprep.subr.mxu0 0.0
        %1042 = vmatpush1.msra.mxu0 0.0
        %1043 = vmatprep.subr.mxu0 0.0
        %1044 = vmatpush1.msra.mxu0 0.0
        %1045 = vmatprep.subr.mxu0 0.0
        %1046 = vmatpush1.msra.mxu0 0.0
        %1047 = vmatprep.subr.mxu0 0.0
        %1048 = vmatpush1.msra.mxu0 0.0
        %1049 = vmatprep.subr.mxu0 0.0
        %1050 = vmatpush1.msra.mxu0 0.0
        %1051 = vmatprep.subr.mxu0 0.0
        %1052 = vmatpush1.msra.mxu0 0.0
        %1053 = vmatprep.subr.mxu0 0.0
        %1054 = vmatpush1.msra.mxu0 0.0
        %1055 = vmatprep.subr.mxu0 0.0
        %1056 = vmatpush1.msra.mxu0 0.0
        %1057 = vmatprep.subr.mxu0 0.0
        %1058 = vmatpush1.msra.mxu0 0.0
        %1059 = vmatprep.mubr.f32.mxu0 0.0
        %1060 = vmatmul.mubr.f32.gmra.mrb[0].mxu0 %v990
        %v1061 = vpop.f32.mrb[0].mxu0
        %v1062 = vadd.f32 0.0, %v1061
        %v1063 = vpop.f32.mrb[0].mxu0
        %1064 = vmatprep.mubr.f32.mxu0 0.0
        %1065 = vmatmul.mubr.f32.gmra.mrb[0].mxu0 %v993
        %v1066 = vpop.f32.mrb[0].mxu0
        %v1067 = vadd.f32 0.0, %v1066
        %v1068 = vpop.f32.mrb[0].mxu0
        %1069 = vdwg.mxu0
        %v1071 = vsel %vm611, %v795, 0
        %v1074 = vsel %vm611, %v800, 0
        %1076 = vmatprep.subr.mxu0 0.0
        %1077 = vmatpush1.msra.mxu0 %v368
        %1078 = vmatprep.subr.mxu0 0.0
        %1079 = vmatpush1.msra.mxu0 %v369
        %1080 = vmatprep.subr.mxu0 0.0
        %1081 = vmatpush1.msra.mxu0 %v370
        %1082 = vmatprep.subr.mxu0 0.0
        %1083 = vmatpush1.msra.mxu0 %v371
        %1084 = vmatprep.subr.mxu0 0.0
        %1085 = vmatpush1.msra.mxu0 0.0
        %1086 = vmatprep.subr.mxu0 0.0
        %1087 = vmatpush1.msra.mxu0 0.0
        %1088 = vmatprep.subr.mxu0 0.0
        %1089 = vmatpush1.msra.mxu0 0.0
        %1090 = vmatprep.subr.mxu0 0.0
        %1091 = vmatpush1.msra.mxu0 0.0
        %1092 = vmatprep.subr.mxu0 0.0
        %1093 = vmatpush1.msra.mxu0 0.0
        %1094 = vmatprep.subr.mxu0 0.0
        %1095 = vmatpush1.msra.mxu0 0.0
        %1096 = vmatprep.subr.mxu0 0.0
        %1097 = vmatpush1.msra.mxu0 0.0
        %1098 = vmatprep.subr.mxu0 0.0
        %1099 = vmatpush1.msra.mxu0 0.0
        %1100 = vmatprep.subr.mxu0 0.0
        %1101 = vmatpush1.msra.mxu0 0.0
        %1102 = vmatprep.subr.mxu0 0.0
        %1103 = vmatpush1.msra.mxu0 0.0
        %1104 = vmatprep.subr.mxu0 0.0
        %1105 = vmatpush1.msra.mxu0 0.0
        %1106 = vmatprep.subr.mxu0 0.0
        %1107 = vmatpush1.msra.mxu0 0.0
        %1108 = vmatprep.subr.mxu0 0.0
        %1109 = vmatpush1.msra.mxu0 0.0
        %1110 = vmatprep.subr.mxu0 0.0
        %1111 = vmatpush1.msra.mxu0 0.0
        %1112 = vmatprep.subr.mxu0 0.0
        %1113 = vmatpush1.msra.mxu0 0.0
        %1114 = vmatprep.subr.mxu0 0.0
        %1115 = vmatpush1.msra.mxu0 0.0
        %1116 = vmatprep.subr.mxu0 0.0
        %1117 = vmatpush1.msra.mxu0 0.0
        %1118 = vmatprep.subr.mxu0 0.0
        %1119 = vmatpush1.msra.mxu0 0.0
        %1120 = vmatprep.subr.mxu0 0.0
        %1121 = vmatpush1.msra.mxu0 0.0
        %1122 = vmatprep.subr.mxu0 0.0
        %1123 = vmatpush1.msra.mxu0 0.0
        %1124 = vmatprep.subr.mxu0 0.0
        %1125 = vmatpush1.msra.mxu0 0.0
        %1126 = vmatprep.subr.mxu0 0.0
        %1127 = vmatpush1.msra.mxu0 0.0
        %1128 = vmatprep.subr.mxu0 0.0
        %1129 = vmatpush1.msra.mxu0 0.0
        %1130 = vmatprep.subr.mxu0 0.0
        %1131 = vmatpush1.msra.mxu0 0.0
        %1132 = vmatprep.subr.mxu0 0.0
        %1133 = vmatpush1.msra.mxu0 0.0
        %1134 = vmatprep.subr.mxu0 0.0
        %1135 = vmatpush1.msra.mxu0 0.0
        %1136 = vmatprep.subr.mxu0 0.0
        %1137 = vmatpush1.msra.mxu0 0.0
        %1138 = vmatprep.subr.mxu0 0.0
        %1139 = vmatpush1.msra.mxu0 0.0
        %1140 = vmatprep.mubr.f32.mxu0 0.0
        %1141 = vmatmul.mubr.f32.gmra.mrb[0].mxu0 %v1071
        %v1142 = vpop.f32.mrb[0].mxu0
        %v1143 = vadd.f32 %v1062, %v1142
        %v1144 = vpop.f32.mrb[0].mxu0
        %1145 = vmatprep.mubr.f32.mxu0 0.0
        %1146 = vmatmul.mubr.f32.gmra.mrb[0].mxu0 %v1074
        %v1147 = vpop.f32.mrb[0].mxu0
        %v1148 = vadd.f32 %v1067, %v1147
        %v1149 = vpop.f32.mrb[0].mxu0
        %1150 = vdwg.mxu0
        %1151 = vrot.lane.b32.xlu0 %v459, 64
        %v1152 = vpop.permute.xlu0 %1151
        %1153 = vrot.lane.b32.xlu0 %v460, 64
        %v1154 = vpop.permute.xlu0 %1153
        %v1155 = vsel %vm611, %v1152, 0
        %v1157 = vsel %vm611, %v1154, 0
        %1159 = vmatprep.subr.mxu0 0.0
        %1160 = vmatpush1.xpose.msra.mxu0 %v619
        %1161 = vmatprep.subr.mxu0 0.0
        %1162 = vmatpush1.xpose.msra.mxu0 %v622
        %1163 = vmatprep.subr.mxu0 0.0
        %1164 = vmatpush1.xpose.msra.mxu0 0.0
        %1165 = vmatprep.subr.mxu0 0.0
        %1166 = vmatpush1.xpose.msra.mxu0 0.0
        %1167 = vmatprep.subr.mxu0 0.0
        %1168 = vmatpush1.xpose.msra.mxu0 0.0
        %1169 = vmatprep.subr.mxu0 0.0
        %1170 = vmatpush1.xpose.msra.mxu0 0.0
        %1171 = vmatprep.subr.mxu0 0.0
        %1172 = vmatpush1.xpose.msra.mxu0 0.0
        %1173 = vmatprep.subr.mxu0 0.0
        %1174 = vmatpush1.xpose.msra.mxu0 0.0
        %1175 = vmatprep.subr.mxu0 0.0
        %1176 = vmatpush1.xpose.msra.mxu0 0.0
        %1177 = vmatprep.subr.mxu0 0.0
        %1178 = vmatpush1.xpose.msra.mxu0 0.0
        %1179 = vmatprep.subr.mxu0 0.0
        %1180 = vmatpush1.xpose.msra.mxu0 0.0
        %1181 = vmatprep.subr.mxu0 0.0
        %1182 = vmatpush1.xpose.msra.mxu0 0.0
        %1183 = vmatprep.subr.mxu0 0.0
        %1184 = vmatpush1.xpose.msra.mxu0 0.0
        %1185 = vmatprep.subr.mxu0 0.0
        %1186 = vmatpush1.xpose.msra.mxu0 0.0
        %1187 = vmatprep.subr.mxu0 0.0
        %1188 = vmatpush1.xpose.msra.mxu0 0.0
        %1189 = vmatprep.subr.mxu0 0.0
        %1190 = vmatpush1.xpose.msra.mxu0 0.0
        %1191 = vmatprep.subr.mxu0 0.0
        %1192 = vmatpush1.xpose.msra.mxu0 0.0
        %1193 = vmatprep.subr.mxu0 0.0
        %1194 = vmatpush1.xpose.msra.mxu0 0.0
        %1195 = vmatprep.subr.mxu0 0.0
        %1196 = vmatpush1.xpose.msra.mxu0 0.0
        %1197 = vmatprep.subr.mxu0 0.0
        %1198 = vmatpush1.xpose.msra.mxu0 0.0
        %1199 = vmatprep.subr.mxu0 0.0
        %1200 = vmatpush1.xpose.msra.mxu0 0.0
        %1201 = vmatprep.subr.mxu0 0.0
        %1202 = vmatpush1.xpose.msra.mxu0 0.0
        %1203 = vmatprep.subr.mxu0 0.0
        %1204 = vmatpush1.xpose.msra.mxu0 0.0
        %1205 = vmatprep.subr.mxu0 0.0
        %1206 = vmatpush1.xpose.msra.mxu0 0.0
        %1207 = vmatprep.subr.mxu0 0.0
        %1208 = vmatpush1.xpose.msra.mxu0 0.0
        %1209 = vmatprep.subr.mxu0 0.0
        %1210 = vmatpush1.xpose.msra.mxu0 0.0
        %1211 = vmatprep.subr.mxu0 0.0
        %1212 = vmatpush1.xpose.msra.mxu0 0.0
        %1213 = vmatprep.subr.mxu0 0.0
        %1214 = vmatpush1.xpose.msra.mxu0 0.0
        %1215 = vmatprep.subr.mxu0 0.0
        %1216 = vmatpush1.xpose.msra.mxu0 0.0
        %1217 = vmatprep.subr.mxu0 0.0
        %1218 = vmatpush1.xpose.msra.mxu0 0.0
        %1219 = vmatprep.subr.mxu0 0.0
        %1220 = vmatpush1.xpose.msra.mxu0 0.0
        %1221 = vmatprep.subr.mxu0 0.0
        %1222 = vmatpush1.xpose.msra.mxu0 0.0
        %1223 = vmatprep.mubr.f32.mxu0 0.0
        %1224 = vmatmul.mubr.f32.gmra.mrb[0].mxu0 %v1155
        %v1225 = vpop.f32.mrb[0].mxu0
        %v1226 = vadd.f32 0.0, %v1225
        %v1227 = vpop.f32.mrb[0].mxu0
        %1228 = vmatprep.mubr.f32.mxu0 0.0
        %1229 = vmatmul.mubr.f32.gmra.mrb[0].mxu0 %v1157
        %v1230 = vpop.f32.mrb[0].mxu0
        %v1231 = vadd.f32 0.0, %v1230
        %v1232 = vpop.f32.mrb[0].mxu0
        %1233 = vdwg.mxu0
        %v1234 = vsel %vm699, %v1226, -inf
        %1235 = vmax.xlane.f32.xlu0 %v1234
        %v1236 = vpop.xlane.xlu0 %1235
        %v1237 = vsel %vm699, %v1231, -inf
        %1238 = vmax.xlane.f32.xlu0 %v1237
        %v1239 = vpop.xlane.xlu0 %1238
        %v1240 = vsub.f32 %v1226, %v1236
        %v1241 = vsub.f32 %v1231, %v1239
        %v1242 = vmul.f32 %v1240, 1.442695
        %v1243 = vpow.pop %v1242
        %v1244 = vmul.f32 %v1241, 1.442695
        %v1245 = vpow.pop %v1244
        %v1246 = vsel %vm699, %v1243, 0.0
        %1247 = vadd.xlane.f32.xlu0 %v1246
        %v1248 = vpop.xlane.xlu0 %1247
        %v1249 = vsel %vm699, %v1245, 0.0
        %1250 = vadd.xlane.f32.xlu0 %v1249
        %v1251 = vpop.xlane.xlu0 %1250
        %v1252 = vrcp.pop %v1248
        %v1253 = vmul.f32 %v1243, %v1252
        %v1254 = vrcp.pop %v1251
        %v1255 = vmul.f32 %v1245, %v1254
        %v1257 = vsel %vm699, %v1253, 0
        %v1260 = vsel %vm699, %v1255, 0
        %1262 = vmatprep.subr.mxu0 0.0
        %1263 = vmatpush1.msra.mxu0 %v603
        %1264 = vmatprep.subr.mxu0 0.0
        %1265 = vmatpush1.msra.mxu0 %v608
        %1266 = vmatprep.subr.mxu0 0.0
        %1267 = vmatpush1.msra.mxu0 0.0
        %1268 = vmatprep.subr.mxu0 0.0
        %1269 = vmatpush1.msra.mxu0 0.0
        %1270 = vmatprep.subr.mxu0 0.0
        %1271 = vmatpush1.msra.mxu0 0.0
        %1272 = vmatprep.subr.mxu0 0.0
        %1273 = vmatpush1.msra.mxu0 0.0
        %1274 = vmatprep.subr.mxu0 0.0
        %1275 = vmatpush1.msra.mxu0 0.0
        %1276 = vmatprep.subr.mxu0 0.0
        %1277 = vmatpush1.msra.mxu0 0.0
        %1278 = vmatprep.subr.mxu0 0.0
        %1279 = vmatpush1.msra.mxu0 0.0
        %1280 = vmatprep.subr.mxu0 0.0
        %1281 = vmatpush1.msra.mxu0 0.0
        %1282 = vmatprep.subr.mxu0 0.0
        %1283 = vmatpush1.msra.mxu0 0.0
        %1284 = vmatprep.subr.mxu0 0.0
        %1285 = vmatpush1.msra.mxu0 0.0
        %1286 = vmatprep.subr.mxu0 0.0
        %1287 = vmatpush1.msra.mxu0 0.0
        %1288 = vmatprep.subr.mxu0 0.0
        %1289 = vmatpush1.msra.mxu0 0.0
        %1290 = vmatprep.subr.mxu0 0.0
        %1291 = vmatpush1.msra.mxu0 0.0
        %1292 = vmatprep.subr.mxu0 0.0
        %1293 = vmatpush1.msra.mxu0 0.0
        %1294 = vmatprep.subr.mxu0 0.0
        %1295 = vmatpush1.msra.mxu0 0.0
        %1296 = vmatprep.subr.mxu0 0.0
        %1297 = vmatpush1.msra.mxu0 0.0
        %1298 = vmatprep.subr.mxu0 0.0
        %1299 = vmatpush1.msra.mxu0 0.0
        %1300 = vmatprep.subr.mxu0 0.0
        %1301 = vmatpush1.msra.mxu0 0.0
        %1302 = vmatprep.subr.mxu0 0.0
        %1303 = vmatpush1.msra.mxu0 0.0
        %1304 = vmatprep.subr.mxu0 0.0
        %1305 = vmatpush1.msra.mxu0 0.0
        %1306 = vmatprep.subr.mxu0 0.0
        %1307 = vmatpush1.msra.mxu0 0.0
        %1308 = vmatprep.subr.mxu0 0.0
        %1309 = vmatpush1.msra.mxu0 0.0
        %1310 = vmatprep.subr.mxu0 0.0
        %1311 = vmatpush1.msra.mxu0 0.0
        %1312 = vmatprep.subr.mxu0 0.0
        %1313 = vmatpush1.msra.mxu0 0.0
        %1314 = vmatprep.subr.mxu0 0.0
        %1315 = vmatpush1.msra.mxu0 0.0
        %1316 = vmatprep.subr.mxu0 0.0
        %1317 = vmatpush1.msra.mxu0 0.0
        %1318 = vmatprep.subr.mxu0 0.0
        %1319 = vmatpush1.msra.mxu0 0.0
        %1320 = vmatprep.subr.mxu0 0.0
        %1321 = vmatpush1.msra.mxu0 0.0
        %1322 = vmatprep.subr.mxu0 0.0
        %1323 = vmatpush1.msra.mxu0 0.0
        %1324 = vmatprep.subr.mxu0 0.0
        %1325 = vmatpush1.msra.mxu0 0.0
        %1326 = vmatprep.mubr.f32.mxu0 0.0
        %1327 = vmatmul.mubr.f32.gmra.mrb[0].mxu0 %v1257
        %v1328 = vpop.f32.mrb[0].mxu0
        %v1329 = vadd.f32 0.0, %v1328
        %v1330 = vpop.f32.mrb[0].mxu0
        %1331 = vmatprep.mubr.f32.mxu0 0.0
        %1332 = vmatmul.mubr.f32.gmra.mrb[0].mxu0 %v1260
        %v1333 = vpop.f32.mrb[0].mxu0
        %v1334 = vadd.f32 0.0, %v1333
        %v1335 = vpop.f32.mrb[0].mxu0
        %1336 = vdwg.mxu0
        %v1338 = vsel %vm611, %v1329, 0
        %v1341 = vsel %vm611, %v1334, 0
        %1343 = vmatprep.subr.mxu0 0.0
        %1344 = vmatpush1.msra.mxu0 %v376
        %1345 = vmatprep.subr.mxu0 0.0
        %1346 = vmatpush1.msra.mxu0 %v377
        %1347 = vmatprep.subr.mxu0 0.0
        %1348 = vmatpush1.msra.mxu0 %v378
        %1349 = vmatprep.subr.mxu0 0.0
        %1350 = vmatpush1.msra.mxu0 %v379
        %1351 = vmatprep.subr.mxu0 0.0
        %1352 = vmatpush1.msra.mxu0 0.0
        %1353 = vmatprep.subr.mxu0 0.0
        %1354 = vmatpush1.msra.mxu0 0.0
        %1355 = vmatprep.subr.mxu0 0.0
        %1356 = vmatpush1.msra.mxu0 0.0
        %1357 = vmatprep.subr.mxu0 0.0
        %1358 = vmatpush1.msra.mxu0 0.0
        %1359 = vmatprep.subr.mxu0 0.0
        %1360 = vmatpush1.msra.mxu0 0.0
        %1361 = vmatprep.subr.mxu0 0.0
        %1362 = vmatpush1.msra.mxu0 0.0
        %1363 = vmatprep.subr.mxu0 0.0
        %1364 = vmatpush1.msra.mxu0 0.0
        %1365 = vmatprep.subr.mxu0 0.0
        %1366 = vmatpush1.msra.mxu0 0.0
        %1367 = vmatprep.subr.mxu0 0.0
        %1368 = vmatpush1.msra.mxu0 0.0
        %1369 = vmatprep.subr.mxu0 0.0
        %1370 = vmatpush1.msra.mxu0 0.0
        %1371 = vmatprep.subr.mxu0 0.0
        %1372 = vmatpush1.msra.mxu0 0.0
        %1373 = vmatprep.subr.mxu0 0.0
        %1374 = vmatpush1.msra.mxu0 0.0
        %1375 = vmatprep.subr.mxu0 0.0
        %1376 = vmatpush1.msra.mxu0 0.0
        %1377 = vmatprep.subr.mxu0 0.0
        %1378 = vmatpush1.msra.mxu0 0.0
        %1379 = vmatprep.subr.mxu0 0.0
        %1380 = vmatpush1.msra.mxu0 0.0
        %1381 = vmatprep.subr.mxu0 0.0
        %1382 = vmatpush1.msra.mxu0 0.0
        %1383 = vmatprep.subr.mxu0 0.0
        %1384 = vmatpush1.msra.mxu0 0.0
        %1385 = vmatprep.subr.mxu0 0.0
        %1386 = vmatpush1.msra.mxu0 0.0
        %1387 = vmatprep.subr.mxu0 0.0
        %1388 = vmatpush1.msra.mxu0 0.0
        %1389 = vmatprep.subr.mxu0 0.0
        %1390 = vmatpush1.msra.mxu0 0.0
        %1391 = vmatprep.subr.mxu0 0.0
        %1392 = vmatpush1.msra.mxu0 0.0
        %1393 = vmatprep.subr.mxu0 0.0
        %1394 = vmatpush1.msra.mxu0 0.0
        %1395 = vmatprep.subr.mxu0 0.0
        %1396 = vmatpush1.msra.mxu0 0.0
        %1397 = vmatprep.subr.mxu0 0.0
        %1398 = vmatpush1.msra.mxu0 0.0
        %1399 = vmatprep.subr.mxu0 0.0
        %1400 = vmatpush1.msra.mxu0 0.0
        %1401 = vmatprep.subr.mxu0 0.0
        %1402 = vmatpush1.msra.mxu0 0.0
        %1403 = vmatprep.subr.mxu0 0.0
        %1404 = vmatpush1.msra.mxu0 0.0
        %1405 = vmatprep.subr.mxu0 0.0
        %1406 = vmatpush1.msra.mxu0 0.0
        %1407 = vmatprep.mubr.f32.mxu0 0.0
        %1408 = vmatmul.mubr.f32.gmra.mrb[0].mxu0 %v1338
        %v1409 = vpop.f32.mrb[0].mxu0
        %v1410 = vadd.f32 0.0, %v1409
        %v1411 = vpop.f32.mrb[0].mxu0
        %1412 = vmatprep.mubr.f32.mxu0 0.0
        %1413 = vmatmul.mubr.f32.gmra.mrb[0].mxu0 %v1341
        %v1414 = vpop.f32.mrb[0].mxu0
        %v1415 = vadd.f32 0.0, %v1414
        %v1416 = vpop.f32.mrb[0].mxu0
        %1417 = vdwg.mxu0
        %v1418 = vadd.f32 %v1143, %v1410
        %v1419 = vadd.f32 %v1148, %v1415
        %1420 = vrot.lane.b32.xlu0 %v459, 32
        %v1421 = vpop.permute.xlu0 %1420
        %1422 = vrot.lane.b32.xlu0 %v460, 32
        %v1423 = vpop.permute.xlu0 %1422
        %v1424 = vsel %vm611, %v1421, 0
        %v1426 = vsel %vm611, %v1423, 0
        %1428 = vmatprep.subr.mxu0 0.0
        %1429 = vmatpush1.xpose.msra.mxu0 %v619
        %1430 = vmatprep.subr.mxu0 0.0
        %1431 = vmatpush1.xpose.msra.mxu0 %v622
        %1432 = vmatprep.subr.mxu0 0.0
        %1433 = vmatpush1.xpose.msra.mxu0 0.0
        %1434 = vmatprep.subr.mxu0 0.0
        %1435 = vmatpush1.xpose.msra.mxu0 0.0
        %1436 = vmatprep.subr.mxu0 0.0
        %1437 = vmatpush1.xpose.msra.mxu0 0.0
        %1438 = vmatprep.subr.mxu0 0.0
        %1439 = vmatpush1.xpose.msra.mxu0 0.0
        %1440 = vmatprep.subr.mxu0 0.0
        %1441 = vmatpush1.xpose.msra.mxu0 0.0
        %1442 = vmatprep.subr.mxu0 0.0
        %1443 = vmatpush1.xpose.msra.mxu0 0.0
        %1444 = vmatprep.subr.mxu0 0.0
        %1445 = vmatpush1.xpose.msra.mxu0 0.0
        %1446 = vmatprep.subr.mxu0 0.0
        %1447 = vmatpush1.xpose.msra.mxu0 0.0
        %1448 = vmatprep.subr.mxu0 0.0
        %1449 = vmatpush1.xpose.msra.mxu0 0.0
        %1450 = vmatprep.subr.mxu0 0.0
        %1451 = vmatpush1.xpose.msra.mxu0 0.0
        %1452 = vmatprep.subr.mxu0 0.0
        %1453 = vmatpush1.xpose.msra.mxu0 0.0
        %1454 = vmatprep.subr.mxu0 0.0
        %1455 = vmatpush1.xpose.msra.mxu0 0.0
        %1456 = vmatprep.subr.mxu0 0.0
        %1457 = vmatpush1.xpose.msra.mxu0 0.0
        %1458 = vmatprep.subr.mxu0 0.0
        %1459 = vmatpush1.xpose.msra.mxu0 0.0
        %1460 = vmatprep.subr.mxu0 0.0
        %1461 = vmatpush1.xpose.msra.mxu0 0.0
        %1462 = vmatprep.subr.mxu0 0.0
        %1463 = vmatpush1.xpose.msra.mxu0 0.0
        %1464 = vmatprep.subr.mxu0 0.0
        %1465 = vmatpush1.xpose.msra.mxu0 0.0
        %1466 = vmatprep.subr.mxu0 0.0
        %1467 = vmatpush1.xpose.msra.mxu0 0.0
        %1468 = vmatprep.subr.mxu0 0.0
        %1469 = vmatpush1.xpose.msra.mxu0 0.0
        %1470 = vmatprep.subr.mxu0 0.0
        %1471 = vmatpush1.xpose.msra.mxu0 0.0
        %1472 = vmatprep.subr.mxu0 0.0
        %1473 = vmatpush1.xpose.msra.mxu0 0.0
        %1474 = vmatprep.subr.mxu0 0.0
        %1475 = vmatpush1.xpose.msra.mxu0 0.0
        %1476 = vmatprep.subr.mxu0 0.0
        %1477 = vmatpush1.xpose.msra.mxu0 0.0
        %1478 = vmatprep.subr.mxu0 0.0
        %1479 = vmatpush1.xpose.msra.mxu0 0.0
        %1480 = vmatprep.subr.mxu0 0.0
        %1481 = vmatpush1.xpose.msra.mxu0 0.0
        %1482 = vmatprep.subr.mxu0 0.0
        %1483 = vmatpush1.xpose.msra.mxu0 0.0
        %1484 = vmatprep.subr.mxu0 0.0
        %1485 = vmatpush1.xpose.msra.mxu0 0.0
        %1486 = vmatprep.subr.mxu0 0.0
        %1487 = vmatpush1.xpose.msra.mxu0 0.0
        %1488 = vmatprep.subr.mxu0 0.0
        %1489 = vmatpush1.xpose.msra.mxu0 0.0
        %1490 = vmatprep.subr.mxu0 0.0
        %1491 = vmatpush1.xpose.msra.mxu0 0.0
        %1492 = vmatprep.mubr.f32.mxu0 0.0
        %1493 = vmatmul.mubr.f32.gmra.mrb[0].mxu0 %v1424
        %v1494 = vpop.f32.mrb[0].mxu0
        %v1495 = vadd.f32 0.0, %v1494
        %v1496 = vpop.f32.mrb[0].mxu0
        %1497 = vmatprep.mubr.f32.mxu0 0.0
        %1498 = vmatmul.mubr.f32.gmra.mrb[0].mxu0 %v1426
        %v1499 = vpop.f32.mrb[0].mxu0
        %v1500 = vadd.f32 0.0, %v1499
        %v1501 = vpop.f32.mrb[0].mxu0
        %1502 = vdwg.mxu0
        %v1503 = vsel %vm699, %v1495, -inf
        %1504 = vmax.xlane.f32.xlu0 %v1503
        %v1505 = vpop.xlane.xlu0 %1504
        %v1506 = vsel %vm699, %v1500, -inf
        %1507 = vmax.xlane.f32.xlu0 %v1506
        %v1508 = vpop.xlane.xlu0 %1507
        %v1509 = vsub.f32 %v1495, %v1505
        %v1510 = vsub.f32 %v1500, %v1508
        %v1511 = vmul.f32 %v1509, 1.442695
        %v1512 = vpow.pop %v1511
        %v1513 = vmul.f32 %v1510, 1.442695
        %v1514 = vpow.pop %v1513
        %v1515 = vsel %vm699, %v1512, 0.0
        %1516 = vadd.xlane.f32.xlu0 %v1515
        %v1517 = vpop.xlane.xlu0 %1516
        %v1518 = vsel %vm699, %v1514, 0.0
        %1519 = vadd.xlane.f32.xlu0 %v1518
        %v1520 = vpop.xlane.xlu0 %1519
        %v1521 = vrcp.pop %v1517
        %v1522 = vmul.f32 %v1512, %v1521
        %v1523 = vrcp.pop %v1520
        %v1524 = vmul.f32 %v1514, %v1523
        %v1526 = vsel %vm699, %v1522, 0
        %v1529 = vsel %vm699, %v1524, 0
        %1531 = vmatprep.subr.mxu0 0.0
        %1532 = vmatpush1.msra.mxu0 %v603
        %1533 = vmatprep.subr.mxu0 0.0
        %1534 = vmatpush1.msra.mxu0 %v608
        %1535 = vmatprep.subr.mxu0 0.0
        %1536 = vmatpush1.msra.mxu0 0.0
        %1537 = vmatprep.subr.mxu0 0.0
        %1538 = vmatpush1.msra.mxu0 0.0
        %1539 = vmatprep.subr.mxu0 0.0
        %1540 = vmatpush1.msra.mxu0 0.0
        %1541 = vmatprep.subr.mxu0 0.0
        %1542 = vmatpush1.msra.mxu0 0.0
        %1543 = vmatprep.subr.mxu0 0.0
        %1544 = vmatpush1.msra.mxu0 0.0
        %1545 = vmatprep.subr.mxu0 0.0
        %1546 = vmatpush1.msra.mxu0 0.0
        %1547 = vmatprep.subr.mxu0 0.0
        %1548 = vmatpush1.msra.mxu0 0.0
        %1549 = vmatprep.subr.mxu0 0.0
        %1550 = vmatpush1.msra.mxu0 0.0
        %1551 = vmatprep.subr.mxu0 0.0
        %1552 = vmatpush1.msra.mxu0 0.0
        %1553 = vmatprep.subr.mxu0 0.0
        %1554 = vmatpush1.msra.mxu0 0.0
        %1555 = vmatprep.subr.mxu0 0.0
        %1556 = vmatpush1.msra.mxu0 0.0
        %1557 = vmatprep.subr.mxu0 0.0
        %1558 = vmatpush1.msra.mxu0 0.0
        %1559 = vmatprep.subr.mxu0 0.0
        %1560 = vmatpush1.msra.mxu0 0.0
        %1561 = vmatprep.subr.mxu0 0.0
        %1562 = vmatpush1.msra.mxu0 0.0
        %1563 = vmatprep.subr.mxu0 0.0
        %1564 = vmatpush1.msra.mxu0 0.0
        %1565 = vmatprep.subr.mxu0 0.0
        %1566 = vmatpush1.msra.mxu0 0.0
        %1567 = vmatprep.subr.mxu0 0.0
        %1568 = vmatpush1.msra.mxu0 0.0
        %1569 = vmatprep.subr.mxu0 0.0
        %1570 = vmatpush1.msra.mxu0 0.0
        %1571 = vmatprep.subr.mxu0 0.0
        %1572 = vmatpush1.msra.mxu0 0.0
        %1573 = vmatprep.subr.mxu0 0.0
        %1574 = vmatpush1.msra.mxu0 0.0
        %1575 = vmatprep.subr.mxu0 0.0
        %1576 = vmatpush1.msra.mxu0 0.0
        %1577 = vmatprep.subr.mxu0 0.0
        %1578 = vmatpush1.msra.mxu0 0.0
        %1579 = vmatprep.subr.mxu0 0.0
        %1580 = vmatpush1.msra.mxu0 0.0
        %1581 = vmatprep.subr.mxu0 0.0
        %1582 = vmatpush1.msra.mxu0 0.0
        %1583 = vmatprep.subr.mxu0 0.0
        %1584 = vmatpush1.msra.mxu0 0.0
        %1585 = vmatprep.subr.mxu0 0.0
        %1586 = vmatpush1.msra.mxu0 0.0
        %1587 = vmatprep.subr.mxu0 0.0
        %1588 = vmatpush1.msra.mxu0 0.0
        %1589 = vmatprep.subr.mxu0 0.0
        %1590 = vmatpush1.msra.mxu0 0.0
        %1591 = vmatprep.subr.mxu0 0.0
        %1592 = vmatpush1.msra.mxu0 0.0
        %1593 = vmatprep.subr.mxu0 0.0
        %1594 = vmatpush1.msra.mxu0 0.0
        %1595 = vmatprep.mubr.f32.mxu0 0.0
        %1596 = vmatmul.mubr.f32.gmra.mrb[0].mxu0 %v1526
        %v1597 = vpop.f32.mrb[0].mxu0
        %v1598 = vadd.f32 0.0, %v1597
        %v1599 = vpop.f32.mrb[0].mxu0
        %1600 = vmatprep.mubr.f32.mxu0 0.0
        %1601 = vmatmul.mubr.f32.gmra.mrb[0].mxu0 %v1529
        %v1602 = vpop.f32.mrb[0].mxu0
        %v1603 = vadd.f32 0.0, %v1602
        %v1604 = vpop.f32.mrb[0].mxu0
        %1605 = vdwg.mxu0
        %v1607 = vsel %vm611, %v1598, 0
        %v1610 = vsel %vm611, %v1603, 0
        %1612 = vmatprep.subr.mxu0 0.0
        %1613 = vmatpush1.msra.mxu0 %v380
        %1614 = vmatprep.subr.mxu0 0.0
        %1615 = vmatpush1.msra.mxu0 %v381
        %1616 = vmatprep.subr.mxu0 0.0
        %1617 = vmatpush1.msra.mxu0 %v382
        %1618 = vmatprep.subr.mxu0 0.0
        %1619 = vmatpush1.msra.mxu0 %v383
        %1620 = vmatprep.subr.mxu0 0.0
        %1621 = vmatpush1.msra.mxu0 0.0
        %1622 = vmatprep.subr.mxu0 0.0
        %1623 = vmatpush1.msra.mxu0 0.0
        %1624 = vmatprep.subr.mxu0 0.0
        %1625 = vmatpush1.msra.mxu0 0.0
        %1626 = vmatprep.subr.mxu0 0.0
        %1627 = vmatpush1.msra.mxu0 0.0
        %1628 = vmatprep.subr.mxu0 0.0
        %1629 = vmatpush1.msra.mxu0 0.0
        %1630 = vmatprep.subr.mxu0 0.0
        %1631 = vmatpush1.msra.mxu0 0.0
        %1632 = vmatprep.subr.mxu0 0.0
        %1633 = vmatpush1.msra.mxu0 0.0
        %1634 = vmatprep.subr.mxu0 0.0
        %1635 = vmatpush1.msra.mxu0 0.0
        %1636 = vmatprep.subr.mxu0 0.0
        %1637 = vmatpush1.msra.mxu0 0.0
        %1638 = vmatprep.subr.mxu0 0.0
        %1639 = vmatpush1.msra.mxu0 0.0
        %1640 = vmatprep.subr.mxu0 0.0
        %1641 = vmatpush1.msra.mxu0 0.0
        %1642 = vmatprep.subr.mxu0 0.0
        %1643 = vmatpush1.msra.mxu0 0.0
        %1644 = vmatprep.subr.mxu0 0.0
        %1645 = vmatpush1.msra.mxu0 0.0
        %1646 = vmatprep.subr.mxu0 0.0
        %1647 = vmatpush1.msra.mxu0 0.0
        %1648 = vmatprep.subr.mxu0 0.0
        %1649 = vmatpush1.msra.mxu0 0.0
        %1650 = vmatprep.subr.mxu0 0.0
        %1651 = vmatpush1.msra.mxu0 0.0
        %1652 = vmatprep.subr.mxu0 0.0
        %1653 = vmatpush1.msra.mxu0 0.0
        %1654 = vmatprep.subr.mxu0 0.0
        %1655 = vmatpush1.msra.mxu0 0.0
        %1656 = vmatprep.subr.mxu0 0.0
        %1657 = vmatpush1.msra.mxu0 0.0
        %1658 = vmatprep.subr.mxu0 0.0
        %1659 = vmatpush1.msra.mxu0 0.0
        %1660 = vmatprep.subr.mxu0 0.0
        %1661 = vmatpush1.msra.mxu0 0.0
        %1662 = vmatprep.subr.mxu0 0.0
        %1663 = vmatpush1.msra.mxu0 0.0
        %1664 = vmatprep.subr.mxu0 0.0
        %1665 = vmatpush1.msra.mxu0 0.0
        %1666 = vmatprep.subr.mxu0 0.0
        %1667 = vmatpush1.msra.mxu0 0.0
        %1668 = vmatprep.subr.mxu0 0.0
        %1669 = vmatpush1.msra.mxu0 0.0
        %1670 = vmatprep.subr.mxu0 0.0
        %1671 = vmatpush1.msra.mxu0 0.0
        %1672 = vmatprep.subr.mxu0 0.0
        %1673 = vmatpush1.msra.mxu0 0.0
        %1674 = vmatprep.subr.mxu0 0.0
        %1675 = vmatpush1.msra.mxu0 0.0
        %1676 = vmatprep.mubr.f32.mxu0 0.0
        %1677 = vmatmul.mubr.f32.gmra.mrb[0].mxu0 %v1607
        %v1678 = vpop.f32.mrb[0].mxu0
        %v1679 = vadd.f32 0.0, %v1678
        %v1680 = vpop.f32.mrb[0].mxu0
        %1681 = vmatprep.mubr.f32.mxu0 0.0
        %1682 = vmatmul.mubr.f32.gmra.mrb[0].mxu0 %v1610
        %v1683 = vpop.f32.mrb[0].mxu0
        %v1684 = vadd.f32 0.0, %v1683
        %v1685 = vpop.f32.mrb[0].mxu0
        %1686 = vdwg.mxu0
        %v1687 = vadd.f32 %v1418, %v1679
        %v1688 = vadd.f32 %v1419, %v1684
        %1689 = vst [vmem:[%s271] sm:$0xff] %v1687
        %1690 = vst [vmem:[%s271 + $0x8] sm:$0xff] %v1688
        %s1691 = sand.u32 %s181, 1
        %s1692 = scalar_lea.sflag [#allocation3], %s1691
        %s1693 = sand.u32 %s181, 1
        %s1694 = smul.addr %s1693, 16
        %s1695 = scalar_lea.vmem [#allocation2], %s1694
        // Predicated region
        $region49: #{tpu_custom_call.1} parent=47 // pred_check
          %p1696 = pneg %p191
        $region50: #{tpu_custom_call.1} parent=47 // pred_check_branch
          %1698 = sbr.rel (%p1696) target = $region52
        $region51: #{tpu_custom_call.1} parent=47 // pred_region
          %s1700 = ssub.s32 256, 256
          %1701 = vsyncadd %s1692, %s1700
          %s1702 = smul.addr %s21, 2
          %s1703 = smul.addr %s1702, 128
          %s1704 = scalar_lea.hbm %s7, %s1703
          %s1705 = sshll.u32 %s1695, 4
          %s1706 = int_to_ptr.vmem [resolvable:$true] %s1705
          %1711 = dma.vmem_to_hbm [thread:$0]  %s1706, 256, %s1704, %s1692, 128, 128, 8
        $region52: #{tpu_custom_call.1} parent=47 // pred_fallthru
          _
      $region48: #{tpu_custom_call.1} parent=5 // pred_fallthru
        _
      %p1712 = scmp.le.s32.totalorder 2, %s16
      // Predicated region
      $region53: #{tpu_custom_call.1} parent=5 // pred_check
        %p1713 = pneg %p1712
      $region54: #{tpu_custom_call.1} parent=5 // pred_check_branch
        %1715 = sbr.rel (%p1713) target = $region56
      $region55: #{tpu_custom_call.1} parent=5 // pred_region
        %s1716 = ssub.s32 %s16, 2
        // Predicated region
        $region57: #{tpu_custom_call.1} parent=55 // pred_check
          %p1717 = pneg %p197
        $region58: #{tpu_custom_call.1} parent=55 // pred_check_branch
          %1719 = sbr.rel (%p1717) target = $region60
        $region59: #{tpu_custom_call.1} parent=55 // pred_region
          %s1720 = sand.u32 %s182, 1
          %s1721 = scalar_lea.sflag [#allocation3], %s1720
          %s1722 = sand.u32 %s182, 1
          %s1723 = smul.addr %s1722, 16
          %s1724 = scalar_lea.vmem [#allocation2], %s1723
          %1725 = dma.done %s1721, 256
        $region60: #{tpu_custom_call.1} parent=55 // pred_fallthru
          _
      $region56: #{tpu_custom_call.1} parent=5 // pred_fallthru
        _
    $region6: #{tpu_custom_call.1} parent=1 // loop_footer
      %s20 = sadd.s32 1, %s16
    $region7: #{tpu_custom_call.1} parent=1 // loop_footer_branch
      %15 = sbr.rel target = $region3
    $region8: #{tpu_custom_call.1} parent=1 // loop_exit
      _
    %1726 = vsyncpa [#allocation3], 1
    %s1727 = scalar_lea.sflag [#allocation3], 1
    %1728 = vsyncpa %s1727, 1

</llo_original>
